<compile_context>
chip_gen: v5e
topology: v5e:2x2
jax: 0.10.0
libtpu: 0.0.40
codegen_flags: <defaults>
</compile_context>

<pallas_src>
import jax
import jax.numpy as jnp
from jax.experimental import pallas as pl
from jax.experimental.pallas import tpu as pltpu

EPS = 1e-5


def _layernorm(h, gamma, beta):
    mu = jnp.mean(h, axis=-1, keepdims=True)
    var = jnp.mean((h - mu) ** 2, axis=-1, keepdims=True)
    return (h - mu) * jax.lax.rsqrt(var + EPS) * gamma + beta


def classifier_kernel(x_ref,
                      w1_ref, b1_ref, g1_ref, be1_ref,
                      w2_ref, b2_ref, g2_ref, be2_ref,
                      w3_ref, b3_ref,
                      out_ref):
    # fc1: Linear(embed_dim, 512) -> LayerNorm(512) -> ReLU -> Dropout(0.3)
    # bf16 operands, f32 MXU accumulation; everything after the dot is f32.
    h = jnp.dot(x_ref[...], w1_ref[...],
                preferred_element_type=jnp.float32) + b1_ref[...]
    h = _layernorm(h, g1_ref[...], be1_ref[...])
    h = jnp.maximum(h, 0.0)
    # Dropout(p=0.3): identity in eval mode.
    # TODO(synk): training-mode dropout would need pltpu.prng_seed + prng_random_bits mask.

    # fc2: Linear(512, 128) -> LayerNorm(128) -> ReLU
    h = jnp.dot(h.astype(jnp.bfloat16), w2_ref[...],
                preferred_element_type=jnp.float32) + b2_ref[...]
    h = _layernorm(h, g2_ref[...], be2_ref[...])
    h = jnp.maximum(h, 0.0)

    # output_layer: Linear(128, C)  (columns zero-padded to 128 lanes)
    out = jnp.dot(h.astype(jnp.bfloat16), w3_ref[...],
                  preferred_element_type=jnp.float32) + b3_ref[...]
    out_ref[...] = out.astype(out_ref.dtype)


def classifier_forward(x, params, *, tile_b=None):
    """x: (B, embed_dim) float32. params: dict of f32 weights (see init_params)."""
    B, D = x.shape
    C = params["w3"].shape[1]

    # ---- lane-dense output: pad class dim (and w3/b3 columns) up to 128 ----
    C_pad = max(128, pl.cdiv(C, 128) * 128)
    w3 = jnp.pad(params["w3"], ((0, 0), (0, C_pad - C)))
    b3 = jnp.pad(params["b3"], ((0, 0), (0, C_pad - C)))

    # ---- bf16 matmul operands (halves weight DMA / VMEM, 2-3x MXU rate) ----
    x_bf = x.astype(jnp.bfloat16)
    w1 = params["w1"].astype(jnp.bfloat16)
    w2 = params["w2"].astype(jnp.bfloat16)
    w3 = w3.astype(jnp.bfloat16)

    # ---- batch tiling: big tiles, multiple of 16 rows (bf16 packing).
    # B<=256 -> single grid step; larger B -> >=2 parallel steps (v7x megacore).
    # Per-step live set at tile_b=256 is only a few MiB, well inside the
    # 32 MiB scoped VMEM budget on every generation (incl. v7x 64 MiB phys). ----
    if tile_b is None:
        tile_b = min(B, 256)
    tile_b = ((tile_b + 15) // 16) * 16
    B_pad = pl.cdiv(B, tile_b) * tile_b
    if B_pad != B:
        x_bf = jnp.pad(x_bf, ((0, B_pad - B), (0, 0)))
    grid_b = B_pad // tile_b

    # Weights / biases / LN params: constant index_map -> resident across steps.
    full = lambda arr: pl.BlockSpec(arr.shape, lambda i: (0, 0))

    out = pl.pallas_call(
        classifier_kernel,
        out_shape=jax.ShapeDtypeStruct((B_pad, C_pad), jnp.float32),
        grid_spec=pltpu.PrefetchScalarGridSpec(
            num_scalar_prefetch=0,
            grid=(grid_b,),
            in_specs=[
                pl.BlockSpec((tile_b, D), lambda i: (i, 0)),   # x tile
                full(w1), full(params["b1"]),
                full(params["g1"]), full(params["be1"]),
                full(w2), full(params["b2"]),
                full(params["g2"]), full(params["be2"]),
                full(w3), full(b3),
            ],
            out_specs=pl.BlockSpec((tile_b, C_pad), lambda i: (i, 0)),
        ),
        compiler_params=pltpu.CompilerParams(
            dimension_semantics=("parallel",)),
    )(x_bf,
      w1, params["b1"], params["g1"], params["be1"],
      w2, params["b2"], params["g2"], params["be2"],
      w3, b3)

    # slice away batch padding and the zero-padded class columns
    return out[:B, :C]


def init_params(key, embed_dim=512, num_classes=13):
    """Deterministic synthetic parameters (shapes match the PyTorch module)."""
    C = num_classes + 3
    k = jax.random.split(key, 6)

    def lin(kw, kb, fan_in, fan_out):
        bound = 1.0 / jnp.sqrt(fan_in)
        w = jax.random.uniform(kw, (fan_in, fan_out), jnp.float32, -bound, bound)
        b = jax.random.uniform(kb, (1, fan_out), jnp.float32, -bound, bound)
        return w, b

    w1, b1 = lin(k[0], k[1], embed_dim, 512)
    w2, b2 = lin(k[2], k[3], 512, 128)
    w3, b3 = lin(k[4], k[5], 128, C)
    return dict(
        w1=w1, b1=b1, g1=jnp.ones((1, 512), jnp.float32), be1=jnp.zeros((1, 512), jnp.float32),
        w2=w2, b2=b2, g2=jnp.ones((1, 128), jnp.float32), be2=jnp.zeros((1, 128), jnp.float32),
        w3=w3, b3=b3,
    )


def _reference(x, p):
    """Pure f32 reference of the PyTorch forward (eval mode)."""
    def ln(h, g, b):
        mu = jnp.mean(h, -1, keepdims=True)
        var = jnp.mean((h - mu) ** 2, -1, keepdims=True)
        return (h - mu) * jax.lax.rsqrt(var + EPS) * g + b
    h = jnp.maximum(ln(x @ p["w1"] + p["b1"], p["g1"], p["be1"]), 0.0)
    h = jnp.maximum(ln(h @ p["w2"] + p["b2"], p["g2"], p["be2"]), 0.0)
    return h @ p["w3"] + p["b3"]


if __name__ == "__main__":
    key = jax.random.PRNGKey(0)
    k_param, k_x = jax.random.split(key)

    embed_dim, num_classes, batch = 512, 13, 16
    params = init_params(k_param, embed_dim=embed_dim, num_classes=num_classes)
    x = jax.random.normal(k_x, (batch, embed_dim), jnp.float32)

    out = classifier_forward(x, params)
    out = jax.block_until_ready(out)

    ref = _reference(x, params)
    assert out.shape == (batch, num_classes + 3)
    # bf16 matmul operands (f32 accumulation) -> loosened tolerance vs f32 ref.
    assert jnp.allclose(out, ref, atol=5e-2, rtol=5e-2), float(jnp.max(jnp.abs(out - ref)))
    print("KERNEL_OK")
</pallas_src>

<mosaic_0001>
module attributes {stable_mosaic.version = 11 : i64} {
  func.func @classifier_kernel(%arg0: i32, %arg1: memref<16x512xbf16, #tpu.memory_space<vmem>>, %arg2: memref<512x512xbf16, #tpu.memory_space<vmem>>, %arg3: memref<1x512xf32, #tpu.memory_space<vmem>>, %arg4: memref<1x512xf32, #tpu.memory_space<vmem>>, %arg5: memref<1x512xf32, #tpu.memory_space<vmem>>, %arg6: memref<512x128xbf16, #tpu.memory_space<vmem>>, %arg7: memref<1x128xf32, #tpu.memory_space<vmem>>, %arg8: memref<1x128xf32, #tpu.memory_space<vmem>>, %arg9: memref<1x128xf32, #tpu.memory_space<vmem>>, %arg10: memref<128x128xbf16, #tpu.memory_space<vmem>>, %arg11: memref<1x128xf32, #tpu.memory_space<vmem>>, %arg12: memref<16x128xf32, #tpu.memory_space<vmem>>) attributes {dimension_semantics = [#tpu.dimension_semantics<parallel>], iteration_bounds = array<i64: 1>, scalar_prefetch = 0 : i64, scratch_operands = 0 : i64, tpu.core_type = #tpu.core_type<tc>, window_params = [{transform_indices = @transform_0, window_bounds = array<i64: 16, 512>}, {pipeline_mode = #tpu.pipeline_mode<synchronous>, transform_indices = @transform_1, window_bounds = array<i64: 512, 512>}, {pipeline_mode = #tpu.pipeline_mode<synchronous>, transform_indices = @transform_2, window_bounds = array<i64: 1, 512>}, {pipeline_mode = #tpu.pipeline_mode<synchronous>, transform_indices = @transform_3, window_bounds = array<i64: 1, 512>}, {pipeline_mode = #tpu.pipeline_mode<synchronous>, transform_indices = @transform_4, window_bounds = array<i64: 1, 512>}, {pipeline_mode = #tpu.pipeline_mode<synchronous>, transform_indices = @transform_5, window_bounds = array<i64: 512, 128>}, {pipeline_mode = #tpu.pipeline_mode<synchronous>, transform_indices = @transform_6, window_bounds = array<i64: 1, 128>}, {pipeline_mode = #tpu.pipeline_mode<synchronous>, transform_indices = @transform_7, window_bounds = array<i64: 1, 128>}, {pipeline_mode = #tpu.pipeline_mode<synchronous>, transform_indices = @transform_8, window_bounds = array<i64: 1, 128>}, {pipeline_mode = #tpu.pipeline_mode<synchronous>, transform_indices = @transform_9, window_bounds = array<i64: 128, 128>}, {pipeline_mode = #tpu.pipeline_mode<synchronous>, transform_indices = @transform_10, window_bounds = array<i64: 1, 128>}, {transform_indices = @transform_11, window_bounds = array<i64: 16, 128>}]} {
    %c0 = arith.constant 0 : index
    %c0_0 = arith.constant 0 : index
    %0 = vector.load %arg1[%c0, %c0_0] : memref<16x512xbf16, #tpu.memory_space<vmem>>, vector<16x512xbf16>
    %c0_1 = arith.constant 0 : index
    %c0_2 = arith.constant 0 : index
    %1 = vector.load %arg2[%c0_1, %c0_2] : memref<512x512xbf16, #tpu.memory_space<vmem>>, vector<512x512xbf16>
    %cst = arith.constant dense<0.000000e+00> : vector<16x512xf32>
    %2 = tpu.matmul %0, %1, %cst {dimension_numbers = #tpu.dot_dimension_numbers<[1], [0], [0], [1], [0, 0, 1, 1], [], []>} : vector<16x512xbf16>, vector<512x512xbf16>, vector<16x512xf32> -> vector<16x512xf32>
    %c0_3 = arith.constant 0 : index
    %c0_4 = arith.constant 0 : index
    %3 = vector.load %arg3[%c0_3, %c0_4] : memref<1x512xf32, #tpu.memory_space<vmem>>, vector<1x512xf32>
    %4 = vector.broadcast %3 : vector<1x512xf32> to vector<16x512xf32>
    %5 = arith.addf %2, %4 : vector<16x512xf32>
    %c0_5 = arith.constant 0 : index
    %c0_6 = arith.constant 0 : index
    %6 = vector.load %arg4[%c0_5, %c0_6] : memref<1x512xf32, #tpu.memory_space<vmem>>, vector<1x512xf32>
    %c0_7 = arith.constant 0 : index
    %c0_8 = arith.constant 0 : index
    %7 = vector.load %arg5[%c0_7, %c0_8] : memref<1x512xf32, #tpu.memory_space<vmem>>, vector<1x512xf32>
    %cst_9 = arith.constant dense<0.000000e+00> : vector<16xf32>
    %8 = vector.multi_reduction <add>, %5, %cst_9 [1] : vector<16x512xf32> to vector<16xf32>
    %9 = vector.shape_cast %8 : vector<16xf32> to vector<16x1xf32>
    %cst_10 = arith.constant 5.120000e+02 : f32
    %10 = vector.broadcast %cst_10 : f32 to vector<16x1xf32>
    %11 = arith.divf %9, %10 : vector<16x1xf32>
    %12 = vector.broadcast %11 : vector<16x1xf32> to vector<16x512xf32>
    %13 = arith.subf %5, %12 : vector<16x512xf32>
    %14 = arith.mulf %13, %13 : vector<16x512xf32>
    %cst_11 = arith.constant dense<0.000000e+00> : vector<16xf32>
    %15 = vector.multi_reduction <add>, %14, %cst_11 [1] : vector<16x512xf32> to vector<16xf32>
    %16 = vector.shape_cast %15 : vector<16xf32> to vector<16x1xf32>
    %cst_12 = arith.constant 5.120000e+02 : f32
    %17 = vector.broadcast %cst_12 : f32 to vector<16x1xf32>
    %18 = arith.divf %16, %17 : vector<16x1xf32>
    %19 = vector.broadcast %11 : vector<16x1xf32> to vector<16x512xf32>
    %20 = arith.subf %5, %19 : vector<16x512xf32>
    %cst_13 = arith.constant 9.99999974E-6 : f32
    %21 = vector.broadcast %cst_13 : f32 to vector<16x1xf32>
    %22 = arith.addf %18, %21 : vector<16x1xf32>
    %23 = math.rsqrt %22 : vector<16x1xf32>
    %24 = vector.broadcast %23 : vector<16x1xf32> to vector<16x512xf32>
    %25 = arith.mulf %20, %24 : vector<16x512xf32>
    %26 = vector.broadcast %6 : vector<1x512xf32> to vector<16x512xf32>
    %27 = arith.mulf %25, %26 : vector<16x512xf32>
    %28 = vector.broadcast %7 : vector<1x512xf32> to vector<16x512xf32>
    %29 = arith.addf %27, %28 : vector<16x512xf32>
    %cst_14 = arith.constant 0.000000e+00 : f32
    %30 = vector.broadcast %cst_14 : f32 to vector<16x512xf32>
    %31 = arith.maximumf %29, %30 : vector<16x512xf32>
    %32 = arith.truncf %31 : vector<16x512xf32> to vector<16x512xbf16>
    %c0_15 = arith.constant 0 : index
    %c0_16 = arith.constant 0 : index
    %33 = vector.load %arg6[%c0_15, %c0_16] : memref<512x128xbf16, #tpu.memory_space<vmem>>, vector<512x128xbf16>
    %cst_17 = arith.constant dense<0.000000e+00> : vector<16x128xf32>
    %34 = tpu.matmul %32, %33, %cst_17 {dimension_numbers = #tpu.dot_dimension_numbers<[1], [0], [0], [1], [0, 0, 1, 1], [], []>} : vector<16x512xbf16>, vector<512x128xbf16>, vector<16x128xf32> -> vector<16x128xf32>
    %c0_18 = arith.constant 0 : index
    %c0_19 = arith.constant 0 : index
    %35 = vector.load %arg7[%c0_18, %c0_19] : memref<1x128xf32, #tpu.memory_space<vmem>>, vector<1x128xf32>
    %36 = vector.broadcast %35 : vector<1x128xf32> to vector<16x128xf32>
    %37 = arith.addf %34, %36 : vector<16x128xf32>
    %c0_20 = arith.constant 0 : index
    %c0_21 = arith.constant 0 : index
    %38 = vector.load %arg8[%c0_20, %c0_21] : memref<1x128xf32, #tpu.memory_space<vmem>>, vector<1x128xf32>
    %c0_22 = arith.constant 0 : index
    %c0_23 = arith.constant 0 : index
    %39 = vector.load %arg9[%c0_22, %c0_23] : memref<1x128xf32, #tpu.memory_space<vmem>>, vector<1x128xf32>
    %cst_24 = arith.constant dense<0.000000e+00> : vector<16xf32>
    %40 = vector.multi_reduction <add>, %37, %cst_24 [1] : vector<16x128xf32> to vector<16xf32>
    %41 = vector.shape_cast %40 : vector<16xf32> to vector<16x1xf32>
    %cst_25 = arith.constant 1.280000e+02 : f32
    %42 = vector.broadcast %cst_25 : f32 to vector<16x1xf32>
    %43 = arith.divf %41, %42 : vector<16x1xf32>
    %44 = vector.broadcast %43 : vector<16x1xf32> to vector<16x128xf32>
    %45 = arith.subf %37, %44 : vector<16x128xf32>
    %46 = arith.mulf %45, %45 : vector<16x128xf32>
    %cst_26 = arith.constant dense<0.000000e+00> : vector<16xf32>
    %47 = vector.multi_reduction <add>, %46, %cst_26 [1] : vector<16x128xf32> to vector<16xf32>
    %48 = vector.shape_cast %47 : vector<16xf32> to vector<16x1xf32>
    %cst_27 = arith.constant 1.280000e+02 : f32
    %49 = vector.broadcast %cst_27 : f32 to vector<16x1xf32>
    %50 = arith.divf %48, %49 : vector<16x1xf32>
    %51 = vector.broadcast %43 : vector<16x1xf32> to vector<16x128xf32>
    %52 = arith.subf %37, %51 : vector<16x128xf32>
    %cst_28 = arith.constant 9.99999974E-6 : f32
    %53 = vector.broadcast %cst_28 : f32 to vector<16x1xf32>
    %54 = arith.addf %50, %53 : vector<16x1xf32>
    %55 = math.rsqrt %54 : vector<16x1xf32>
    %56 = vector.broadcast %55 : vector<16x1xf32> to vector<16x128xf32>
    %57 = arith.mulf %52, %56 : vector<16x128xf32>
    %58 = vector.broadcast %38 : vector<1x128xf32> to vector<16x128xf32>
    %59 = arith.mulf %57, %58 : vector<16x128xf32>
    %60 = vector.broadcast %39 : vector<1x128xf32> to vector<16x128xf32>
    %61 = arith.addf %59, %60 : vector<16x128xf32>
    %cst_29 = arith.constant 0.000000e+00 : f32
    %62 = vector.broadcast %cst_29 : f32 to vector<16x128xf32>
    %63 = arith.maximumf %61, %62 : vector<16x128xf32>
    %64 = arith.truncf %63 : vector<16x128xf32> to vector<16x128xbf16>
    %c0_30 = arith.constant 0 : index
    %c0_31 = arith.constant 0 : index
    %65 = vector.load %arg10[%c0_30, %c0_31] : memref<128x128xbf16, #tpu.memory_space<vmem>>, vector<128x128xbf16>
    %cst_32 = arith.constant dense<0.000000e+00> : vector<16x128xf32>
    %66 = tpu.matmul %64, %65, %cst_32 {dimension_numbers = #tpu.dot_dimension_numbers<[1], [0], [0], [1], [0, 0, 1, 1], [], []>} : vector<16x128xbf16>, vector<128x128xbf16>, vector<16x128xf32> -> vector<16x128xf32>
    %c0_33 = arith.constant 0 : index
    %c0_34 = arith.constant 0 : index
    %67 = vector.load %arg11[%c0_33, %c0_34] : memref<1x128xf32, #tpu.memory_space<vmem>>, vector<1x128xf32>
    %68 = vector.broadcast %67 : vector<1x128xf32> to vector<16x128xf32>
    %69 = arith.addf %66, %68 : vector<16x128xf32>
    %c0_35 = arith.constant 0 : index
    %c0_36 = arith.constant 0 : index
    %70 = vector.load %arg12[%c0_35, %c0_36] : memref<16x128xf32, #tpu.memory_space<vmem>>, vector<16x128xf32>
    tpu.vector_store %arg12[%c0_35, %c0_36], %69 {strides = array<i32>} : memref<16x128xf32, #tpu.memory_space<vmem>>, vector<16x128xf32>,
    return
  }
  func.func @transform_0(%arg0: i32) -> (i32, i32) {
    %c0_i32 = arith.constant 0 : i32
    %c0_i32_0 = arith.constant 0 : i32
    return %arg0, %c0_i32 : i32, i32
  }
  func.func @transform_1(%arg0: i32) -> (i32, i32) {
    %c0_i32 = arith.constant 0 : i32
    %c0_i32_0 = arith.constant 0 : i32
    %c0_i32_1 = arith.constant 0 : i32
    return %c0_i32, %c0_i32_0 : i32, i32
  }
  func.func @transform_2(%arg0: i32) -> (i32, i32) {
    %c0_i32 = arith.constant 0 : i32
    %c0_i32_0 = arith.constant 0 : i32
    %c0_i32_1 = arith.constant 0 : i32
    return %c0_i32, %c0_i32_0 : i32, i32
  }
  func.func @transform_3(%arg0: i32) -> (i32, i32) {
    %c0_i32 = arith.constant 0 : i32
    %c0_i32_0 = arith.constant 0 : i32
    %c0_i32_1 = arith.constant 0 : i32
    return %c0_i32, %c0_i32_0 : i32, i32
  }
  func.func @transform_4(%arg0: i32) -> (i32, i32) {
    %c0_i32 = arith.constant 0 : i32
    %c0_i32_0 = arith.constant 0 : i32
    %c0_i32_1 = arith.constant 0 : i32
    return %c0_i32, %c0_i32_0 : i32, i32
  }
  func.func @transform_5(%arg0: i32) -> (i32, i32) {
    %c0_i32 = arith.constant 0 : i32
    %c0_i32_0 = arith.constant 0 : i32
    %c0_i32_1 = arith.constant 0 : i32
    return %c0_i32, %c0_i32_0 : i32, i32
  }
  func.func @transform_6(%arg0: i32) -> (i32, i32) {
    %c0_i32 = arith.constant 0 : i32
    %c0_i32_0 = arith.constant 0 : i32
    %c0_i32_1 = arith.constant 0 : i32
    return %c0_i32, %c0_i32_0 : i32, i32
  }
  func.func @transform_7(%arg0: i32) -> (i32, i32) {
    %c0_i32 = arith.constant 0 : i32
    %c0_i32_0 = arith.constant 0 : i32
    %c0_i32_1 = arith.constant 0 : i32
    return %c0_i32, %c0_i32_0 : i32, i32
  }
  func.func @transform_8(%arg0: i32) -> (i32, i32) {
    %c0_i32 = arith.constant 0 : i32
    %c0_i32_0 = arith.constant 0 : i32
    %c0_i32_1 = arith.constant 0 : i32
    return %c0_i32, %c0_i32_0 : i32, i32
  }
  func.func @transform_9(%arg0: i32) -> (i32, i32) {
    %c0_i32 = arith.constant 0 : i32
    %c0_i32_0 = arith.constant 0 : i32
    %c0_i32_1 = arith.constant 0 : i32
    return %c0_i32, %c0_i32_0 : i32, i32
  }
  func.func @transform_10(%arg0: i32) -> (i32, i32) {
    %c0_i32 = arith.constant 0 : i32
    %c0_i32_0 = arith.constant 0 : i32
    %c0_i32_1 = arith.constant 0 : i32
    return %c0_i32, %c0_i32_0 : i32, i32
  }
  func.func @transform_11(%arg0: i32) -> (i32, i32) {
    %c0_i32 = arith.constant 0 : i32
    %c0_i32_0 = arith.constant 0 : i32
    return %arg0, %c0_i32 : i32, i32
  }
}

</mosaic_0001>

<llo_original>
// kernel: tpu_custom_call.1
$region0: #{tpu_custom_call.1}
  #allocation0 [shape = 'u32[]', space=smem, size = 0x4, offset = 0x4, fixed_abs, tag = 'smem constant byte address 0x4 - core index']
  #allocation1 [shape = 'u32[72,128]{1,0:T(1,128)}', space=vmem, size = 0x9000, scoped, tag = 'internal scratch']
  %s0 = inlined_call_operand.hbm [shape: bf16[16,512], index: 0, kind: input, shape index: {}]
  %s1 = inlined_call_operand.hbm [shape: bf16[512,512], index: 1, kind: input, shape index: {}]
  %s2 = inlined_call_operand.hbm [shape: f32[1,512], index: 2, kind: input, shape index: {}]
  %s3 = inlined_call_operand.hbm [shape: f32[1,512], index: 3, kind: input, shape index: {}]
  %s4 = inlined_call_operand.hbm [shape: f32[1,512], index: 4, kind: input, shape index: {}]
  %s5 = inlined_call_operand.hbm [shape: bf16[512,128], index: 5, kind: input, shape index: {}]
  %s6 = inlined_call_operand.vmem [shape: f32[1,128], index: 6, kind: input, shape index: {}]
  %s7 = inlined_call_operand.vmem [shape: f32[1,128], index: 7, kind: input, shape index: {}]
  %s8 = inlined_call_operand.vmem [shape: f32[1,128], index: 8, kind: input, shape index: {}]
  %s9 = inlined_call_operand.hbm [shape: bf16[128,128], index: 9, kind: input, shape index: {}]
  %s10 = inlined_call_operand.vmem [shape: f32[1,128], index: 10, kind: input, shape index: {}]
  %s11 = inlined_call_operand.hbm [shape: f32[16,128], index: 11, kind: output, shape index: {}]
  %s12 = sld [smem:[#allocation0]]
  $region82: #{tpu_custom_call.1} parent=0
    _
  %s14 = ssub.s32 1, %s12
  %s15 = scalar_select 0, %s14, %s12
  $region1: #{tpu_custom_call.1} parent=0
    #allocation2 [shape = 'u8[16384]{0}', space=vmem, size = 0x4000, scoped, tag = 'input window, operand 0, single buffered']
    #allocation3 [shape = 's32[1]{0}', space=sflag, size = 0x4, scoped, tag = 'scoped memory for tpu_custom_call.1']
    #allocation4 [shape = 's32[1]{0}', space=sflag, size = 0x4, scoped, tag = 'scoped memory for tpu_custom_call.1']
    #allocation5 [shape = 'u8[524288]{0}', space=vmem, size = 0x80000, scoped, tag = 'input window, operand 1, single buffered']
    #allocation6 [shape = 's32[1]{0}', space=sflag, size = 0x4, scoped, tag = 'scoped memory for tpu_custom_call.1']
    #allocation7 [shape = 'u8[2048]{0}', space=vmem, size = 0x800, scoped, tag = 'input window, operand 2, single buffered']
    #allocation8 [shape = 'u8[2048]{0}', space=vmem, size = 0x800, scoped, tag = 'input window, operand 3, single buffered']
    #allocation9 [shape = 's32[1]{0}', space=sflag, size = 0x4, scoped, tag = 'scoped memory for tpu_custom_call.1']
    #allocation10 [shape = 'u8[2048]{0}', space=vmem, size = 0x800, scoped, tag = 'input window, operand 4, single buffered']
    #allocation11 [shape = 'u8[131072]{0}', space=vmem, size = 0x20000, scoped, tag = 'input window, operand 5, single buffered']
    #allocation12 [shape = 's32[1]{0}', space=sflag, size = 0x4, scoped, tag = 'scoped memory for tpu_custom_call.1']
    #allocation13 [shape = 'u8[32768]{0}', space=vmem, size = 0x8000, scoped, tag = 'input window, operand 9, single buffered']
    #allocation14 [shape = 'u8[8192]{0}', space=vmem, size = 0x2000, scoped, tag = 'output window, operand 0, single buffered']
    %16 = vsyncpa [#allocation3], 0
    %17 = vsyncpa [#allocation6], 0
    %18 = vsyncpa [#allocation9], 0
    %19 = vsyncpa [#allocation12], 0
    %20 = vsyncpa [#allocation4], 0
    // Predicated region
    $region2: #{tpu_custom_call.1} parent=1 // pred_check
      _
    $region3: #{tpu_custom_call.1} parent=1 // pred_check_branch
      %22 = sbr.rel (0) target = $region5
    $region4: #{tpu_custom_call.1} parent=1 // pred_region
      %24 = vsyncadd [#allocation3], 0
      %s25 = sshll.u32 %s0, 4
      %s26 = int_to_ptr.hbm [resolvable:$true] %s25
      %s27 = sshll.u32 [#allocation2], 4
      %s28 = int_to_ptr.vmem [resolvable:$true] %s27
      %33 = dma.hbm_to_vmem [thread:$0]  %s26, 512, %s28, [#allocation3], 256, 256, 16
    $region5: #{tpu_custom_call.1} parent=1 // pred_fallthru
      _
    // Predicated region
    $region6: #{tpu_custom_call.1} parent=1 // pred_check
      _
    $region7: #{tpu_custom_call.1} parent=1 // pred_check_branch
      %35 = sbr.rel (0) target = $region9
    $region8: #{tpu_custom_call.1} parent=1 // pred_region
      %37 = vsyncadd [#allocation6], 0
      %s38 = sshll.u32 %s1, 4
      %s39 = int_to_ptr.hbm [resolvable:$true] %s38
      %s40 = sshll.u32 [#allocation5], 4
      %s41 = int_to_ptr.vmem [resolvable:$true] %s40
      %46 = dma.hbm_to_vmem [thread:$0]  %s39, 16384, %s41, [#allocation6], 256, 256, 16
    $region9: #{tpu_custom_call.1} parent=1 // pred_fallthru
      _
    // Predicated region
    $region10: #{tpu_custom_call.1} parent=1 // pred_check
      _
    $region11: #{tpu_custom_call.1} parent=1 // pred_check_branch
      %48 = sbr.rel (0) target = $region13
    $region12: #{tpu_custom_call.1} parent=1 // pred_region
      %50 = vsyncadd [#allocation6], 0
      %s52 = sshll.u32 %s2, 4
      %s53 = int_to_ptr.hbm [resolvable:$true] %s52
      %s54 = sshll.u32 [#allocation7], 4
      %s55 = int_to_ptr.vmem [resolvable:$true] %s54
      %57 = dma.hbm_to_vmem [thread:$0]  %s53, 64, %s55, [#allocation6]
    $region13: #{tpu_custom_call.1} parent=1 // pred_fallthru
      _
    // Predicated region
    $region14: #{tpu_custom_call.1} parent=1 // pred_check
      _
    $region15: #{tpu_custom_call.1} parent=1 // pred_check_branch
      %59 = sbr.rel (0) target = $region17
    $region16: #{tpu_custom_call.1} parent=1 // pred_region
      %61 = vsyncadd [#allocation9], 0
      %s63 = sshll.u32 %s3, 4
      %s64 = int_to_ptr.hbm [resolvable:$true] %s63
      %s65 = sshll.u32 [#allocation8], 4
      %s66 = int_to_ptr.vmem [resolvable:$true] %s65
      %68 = dma.hbm_to_vmem [thread:$0]  %s64, 64, %s66, [#allocation9]
    $region17: #{tpu_custom_call.1} parent=1 // pred_fallthru
      _
    // Predicated region
    $region18: #{tpu_custom_call.1} parent=1 // pred_check
      _
    $region19: #{tpu_custom_call.1} parent=1 // pred_check_branch
      %70 = sbr.rel (0) target = $region21
    $region20: #{tpu_custom_call.1} parent=1 // pred_region
      %72 = vsyncadd [#allocation9], 0
      %s74 = sshll.u32 %s4, 4
      %s75 = int_to_ptr.hbm [resolvable:$true] %s74
      %s76 = sshll.u32 [#allocation10], 4
      %s77 = int_to_ptr.vmem [resolvable:$true] %s76
      %79 = dma.hbm_to_vmem [thread:$0]  %s75, 64, %s77, [#allocation9]
    $region21: #{tpu_custom_call.1} parent=1 // pred_fallthru
      _
    // Predicated region
    $region22: #{tpu_custom_call.1} parent=1 // pred_check
      _
    $region23: #{tpu_custom_call.1} parent=1 // pred_check_branch
      %81 = sbr.rel (0) target = $region25
    $region24: #{tpu_custom_call.1} parent=1 // pred_region
      %83 = vsyncadd [#allocation12], 0
      %s84 = sshll.u32 %s5, 4
      %s85 = int_to_ptr.hbm [resolvable:$true] %s84
      %s86 = sshll.u32 [#allocation11], 4
      %s87 = int_to_ptr.vmem [resolvable:$true] %s86
      %92 = dma.hbm_to_vmem [thread:$0]  %s85, 4096, %s87, [#allocation12], 64, 64, 4
    $region25: #{tpu_custom_call.1} parent=1 // pred_fallthru
      _
    // Predicated region
    $region26: #{tpu_custom_call.1} parent=1 // pred_check
      _
    $region27: #{tpu_custom_call.1} parent=1 // pred_check_branch
      %94 = sbr.rel (0) target = $region29
    $region28: #{tpu_custom_call.1} parent=1 // pred_region
      _
    $region29: #{tpu_custom_call.1} parent=1 // pred_fallthru
      _
    // Predicated region
    $region30: #{tpu_custom_call.1} parent=1 // pred_check
      _
    $region31: #{tpu_custom_call.1} parent=1 // pred_check_branch
      %96 = sbr.rel (0) target = $region33
    $region32: #{tpu_custom_call.1} parent=1 // pred_region
      _
    $region33: #{tpu_custom_call.1} parent=1 // pred_fallthru
      _
    // Predicated region
    $region34: #{tpu_custom_call.1} parent=1 // pred_check
      _
    $region35: #{tpu_custom_call.1} parent=1 // pred_check_branch
      %98 = sbr.rel (0) target = $region37
    $region36: #{tpu_custom_call.1} parent=1 // pred_region
      _
    $region37: #{tpu_custom_call.1} parent=1 // pred_fallthru
      _
    // Predicated region
    $region38: #{tpu_custom_call.1} parent=1 // pred_check
      _
    $region39: #{tpu_custom_call.1} parent=1 // pred_check_branch
      %100 = sbr.rel (0) target = $region41
    $region40: #{tpu_custom_call.1} parent=1 // pred_region
      %102 = vsyncadd [#allocation12], 0
      %s103 = sshll.u32 %s9, 4
      %s104 = int_to_ptr.hbm [resolvable:$true] %s103
      %s105 = sshll.u32 [#allocation13], 4
      %s106 = int_to_ptr.vmem [resolvable:$true] %s105
      %111 = dma.hbm_to_vmem [thread:$0]  %s104, 1024, %s106, [#allocation12], 64, 64, 4
    $region41: #{tpu_custom_call.1} parent=1 // pred_fallthru
      _
    // Predicated region
    $region42: #{tpu_custom_call.1} parent=1 // pred_check
      _
    $region43: #{tpu_custom_call.1} parent=1 // pred_check_branch
      %113 = sbr.rel (0) target = $region45
    $region44: #{tpu_custom_call.1} parent=1 // pred_region
      _
    $region45: #{tpu_custom_call.1} parent=1 // pred_fallthru
      _
    // Predicated region
    $region46: #{tpu_custom_call.1} parent=1 // pred_check
      _
    $region47: #{tpu_custom_call.1} parent=1 // pred_check_branch
      %115 = sbr.rel (0) target = $region49
    $region48: #{tpu_custom_call.1} parent=1 // pred_region
      %117 = dma.done [#allocation3], 512
    $region49: #{tpu_custom_call.1} parent=1 // pred_fallthru
      _
    // Predicated region
    $region50: #{tpu_custom_call.1} parent=1 // pred_check
      _
    $region51: #{tpu_custom_call.1} parent=1 // pred_check_branch
      %119 = sbr.rel (0) target = $region53
    $region52: #{tpu_custom_call.1} parent=1 // pred_region
      %121 = dma.done [#allocation6], 16384
    $region53: #{tpu_custom_call.1} parent=1 // pred_fallthru
      _
    // Predicated region
    $region54: #{tpu_custom_call.1} parent=1 // pred_check
      _
    $region55: #{tpu_custom_call.1} parent=1 // pred_check_branch
      %123 = sbr.rel (0) target = $region57
    $region56: #{tpu_custom_call.1} parent=1 // pred_region
      %125 = dma.done [#allocation6], 64
    $region57: #{tpu_custom_call.1} parent=1 // pred_fallthru
      _
    // Predicated region
    $region58: #{tpu_custom_call.1} parent=1 // pred_check
      _
    $region59: #{tpu_custom_call.1} parent=1 // pred_check_branch
      %127 = sbr.rel (0) target = $region61
    $region60: #{tpu_custom_call.1} parent=1 // pred_region
      %129 = dma.done [#allocation9], 64
    $region61: #{tpu_custom_call.1} parent=1 // pred_fallthru
      _
    // Predicated region
    $region62: #{tpu_custom_call.1} parent=1 // pred_check
      _
    $region63: #{tpu_custom_call.1} parent=1 // pred_check_branch
      %131 = sbr.rel (0) target = $region65
    $region64: #{tpu_custom_call.1} parent=1 // pred_region
      %133 = dma.done [#allocation9], 64
    $region65: #{tpu_custom_call.1} parent=1 // pred_fallthru
      _
    // Predicated region
    $region66: #{tpu_custom_call.1} parent=1 // pred_check
      _
    $region67: #{tpu_custom_call.1} parent=1 // pred_check_branch
      %135 = sbr.rel (0) target = $region69
    $region68: #{tpu_custom_call.1} parent=1 // pred_region
      %137 = dma.done [#allocation12], 4096
    $region69: #{tpu_custom_call.1} parent=1 // pred_fallthru
      _
    // Predicated region
    $region70: #{tpu_custom_call.1} parent=1 // pred_check
      _
    $region71: #{tpu_custom_call.1} parent=1 // pred_check_branch
      %139 = sbr.rel (0) target = $region73
    $region72: #{tpu_custom_call.1} parent=1 // pred_region
      %141 = dma.done [#allocation12], 1024
    $region73: #{tpu_custom_call.1} parent=1 // pred_fallthru
      _
    %v142 = vld [vmem:[#allocation2] sm:$0xff]
    %v143 = vld [vmem:[#allocation2 + $0x8] sm:$0xff]
    %v144 = vld [vmem:[#allocation2 + $0x10] sm:$0xff]
    %v145 = vld [vmem:[#allocation2 + $0x18] sm:$0xff]
    %v146 = vld [vmem:[#allocation5] sm:$0xff]
    %v147 = vld [vmem:[#allocation5 + $0x8] sm:$0xff]
    %v148 = vld [vmem:[#allocation5 + $0x10] sm:$0xff]
    %v149 = vld [vmem:[#allocation5 + $0x18] sm:$0xff]
    %v150 = vld [vmem:[#allocation5 + $0x20] sm:$0xff]
    %v151 = vld [vmem:[#allocation5 + $0x28] sm:$0xff]
    %v152 = vld [vmem:[#allocation5 + $0x30] sm:$0xff]
    %v153 = vld [vmem:[#allocation5 + $0x38] sm:$0xff]
    %v154 = vld [vmem:[#allocation5 + $0x40] sm:$0xff]
    %v155 = vld [vmem:[#allocation5 + $0x48] sm:$0xff]
    %v156 = vld [vmem:[#allocation5 + $0x50] sm:$0xff]
    %v157 = vld [vmem:[#allocation5 + $0x58] sm:$0xff]
    %v158 = vld [vmem:[#allocation5 + $0x60] sm:$0xff]
    %v159 = vld [vmem:[#allocation5 + $0x68] sm:$0xff]
    %v160 = vld [vmem:[#allocation5 + $0x70] sm:$0xff]
    %v161 = vld [vmem:[#allocation5 + $0x78] sm:$0xff]
    %v162 = vld [vmem:[#allocation5 + $0x80] sm:$0xff]
    %v163 = vld [vmem:[#allocation5 + $0x88] sm:$0xff]
    %v164 = vld [vmem:[#allocation5 + $0x90] sm:$0xff]
    %v165 = vld [vmem:[#allocation5 + $0x98] sm:$0xff]
    %v166 = vld [vmem:[#allocation5 + $0xa0] sm:$0xff]
    %v167 = vld [vmem:[#allocation5 + $0xa8] sm:$0xff]
    %v168 = vld [vmem:[#allocation5 + $0xb0] sm:$0xff]
    %v169 = vld [vmem:[#allocation5 + $0xb8] sm:$0xff]
    %v170 = vld [vmem:[#allocation5 + $0xc0] sm:$0xff]
    %v171 = vld [vmem:[#allocation5 + $0xc8] sm:$0xff]
    %v172 = vld [vmem:[#allocation5 + $0xd0] sm:$0xff]
    %v173 = vld [vmem:[#allocation5 + $0xd8] sm:$0xff]
    %v174 = vld [vmem:[#allocation5 + $0xe0] sm:$0xff]
    %v175 = vld [vmem:[#allocation5 + $0xe8] sm:$0xff]
    %v176 = vld [vmem:[#allocation5 + $0xf0] sm:$0xff]
    %v177 = vld [vmem:[#allocation5 + $0xf8] sm:$0xff]
    %v178 = vld [vmem:[#allocation5 + $0x100] sm:$0xff]
    %v179 = vld [vmem:[#allocation5 + $0x108] sm:$0xff]
    %v180 = vld [vmem:[#allocation5 + $0x110] sm:$0xff]
    %v181 = vld [vmem:[#allocation5 + $0x118] sm:$0xff]
    %v182 = vld [vmem:[#allocation5 + $0x120] sm:$0xff]
    %v183 = vld [vmem:[#allocation5 + $0x128] sm:$0xff]
    %v184 = vld [vmem:[#allocation5 + $0x130] sm:$0xff]
    %v185 = vld [vmem:[#allocation5 + $0x138] sm:$0xff]
    %v186 = vld [vmem:[#allocation5 + $0x140] sm:$0xff]
    %v187 = vld [vmem:[#allocation5 + $0x148] sm:$0xff]
    %v188 = vld [vmem:[#allocation5 + $0x150] sm:$0xff]
    %v189 = vld [vmem:[#allocation5 + $0x158] sm:$0xff]
    %v190 = vld [vmem:[#allocation5 + $0x160] sm:$0xff]
    %v191 = vld [vmem:[#allocation5 + $0x168] sm:$0xff]
    %v192 = vld [vmem:[#allocation5 + $0x170] sm:$0xff]
    %v193 = vld [vmem:[#allocation5 + $0x178] sm:$0xff]
    %v194 = vld [vmem:[#allocation5 + $0x180] sm:$0xff]
    %v195 = vld [vmem:[#allocation5 + $0x188] sm:$0xff]
    %v196 = vld [vmem:[#allocation5 + $0x190] sm:$0xff]
    %v197 = vld [vmem:[#allocation5 + $0x198] sm:$0xff]
    %v198 = vld [vmem:[#allocation5 + $0x1a0] sm:$0xff]
    %v199 = vld [vmem:[#allocation5 + $0x1a8] sm:$0xff]
    %v200 = vld [vmem:[#allocation5 + $0x1b0] sm:$0xff]
    %v201 = vld [vmem:[#allocation5 + $0x1b8] sm:$0xff]
    %v202 = vld [vmem:[#allocation5 + $0x1c0] sm:$0xff]
    %v203 = vld [vmem:[#allocation5 + $0x1c8] sm:$0xff]
    %v204 = vld [vmem:[#allocation5 + $0x1d0] sm:$0xff]
    %v205 = vld [vmem:[#allocation5 + $0x1d8] sm:$0xff]
    %v206 = vld [vmem:[#allocation5 + $0x1e0] sm:$0xff]
    %v207 = vld [vmem:[#allocation5 + $0x1e8] sm:$0xff]
    %v208 = vld [vmem:[#allocation5 + $0x1f0] sm:$0xff]
    %v209 = vld [vmem:[#allocation5 + $0x1f8] sm:$0xff]
    %v210 = vld [vmem:[#allocation5 + $0x200] sm:$0xff]
    %v211 = vld [vmem:[#allocation5 + $0x208] sm:$0xff]
    %v212 = vld [vmem:[#allocation5 + $0x210] sm:$0xff]
    %v213 = vld [vmem:[#allocation5 + $0x218] sm:$0xff]
    %v214 = vld [vmem:[#allocation5 + $0x220] sm:$0xff]
    %v215 = vld [vmem:[#allocation5 + $0x228] sm:$0xff]
    %v216 = vld [vmem:[#allocation5 + $0x230] sm:$0xff]
    %v217 = vld [vmem:[#allocation5 + $0x238] sm:$0xff]
    %v218 = vld [vmem:[#allocation5 + $0x240] sm:$0xff]
    %v219 = vld [vmem:[#allocation5 + $0x248] sm:$0xff]
    %v220 = vld [vmem:[#allocation5 + $0x250] sm:$0xff]
    %v221 = vld [vmem:[#allocation5 + $0x258] sm:$0xff]
    %v222 = vld [vmem:[#allocation5 + $0x260] sm:$0xff]
    %v223 = vld [vmem:[#allocation5 + $0x268] sm:$0xff]
    %v224 = vld [vmem:[#allocation5 + $0x270] sm:$0xff]
    %v225 = vld [vmem:[#allocation5 + $0x278] sm:$0xff]
    %v226 = vld [vmem:[#allocation5 + $0x280] sm:$0xff]
    %v227 = vld [vmem:[#allocation5 + $0x288] sm:$0xff]
    %v228 = vld [vmem:[#allocation5 + $0x290] sm:$0xff]
    %v229 = vld [vmem:[#allocation5 + $0x298] sm:$0xff]
    %v230 = vld [vmem:[#allocation5 + $0x2a0] sm:$0xff]
    %v231 = vld [vmem:[#allocation5 + $0x2a8] sm:$0xff]
    %v232 = vld [vmem:[#allocation5 + $0x2b0] sm:$0xff]
    %v233 = vld [vmem:[#allocation5 + $0x2b8] sm:$0xff]
    %v234 = vld [vmem:[#allocation5 + $0x2c0] sm:$0xff]
    %v235 = vld [vmem:[#allocation5 + $0x2c8] sm:$0xff]
    %v236 = vld [vmem:[#allocation5 + $0x2d0] sm:$0xff]
    %v237 = vld [vmem:[#allocation5 + $0x2d8] sm:$0xff]
    %v238 = vld [vmem:[#allocation5 + $0x2e0] sm:$0xff]
    %v239 = vld [vmem:[#allocation5 + $0x2e8] sm:$0xff]
    %v240 = vld [vmem:[#allocation5 + $0x2f0] sm:$0xff]
    %v241 = vld [vmem:[#allocation5 + $0x2f8] sm:$0xff]
    %v242 = vld [vmem:[#allocation5 + $0x300] sm:$0xff]
    %v243 = vld [vmem:[#allocation5 + $0x308] sm:$0xff]
    %v244 = vld [vmem:[#allocation5 + $0x310] sm:$0xff]
    %v245 = vld [vmem:[#allocation5 + $0x318] sm:$0xff]
    %v246 = vld [vmem:[#allocation5 + $0x320] sm:$0xff]
    %v247 = vld [vmem:[#allocation5 + $0x328] sm:$0xff]
    %v248 = vld [vmem:[#allocation5 + $0x330] sm:$0xff]
    %v249 = vld [vmem:[#allocation5 + $0x338] sm:$0xff]
    %v250 = vld [vmem:[#allocation5 + $0x340] sm:$0xff]
    %v251 = vld [vmem:[#allocation5 + $0x348] sm:$0xff]
    %v252 = vld [vmem:[#allocation5 + $0x350] sm:$0xff]
    %v253 = vld [vmem:[#allocation5 + $0x358] sm:$0xff]
    %v254 = vld [vmem:[#allocation5 + $0x360] sm:$0xff]
    %v255 = vld [vmem:[#allocation5 + $0x368] sm:$0xff]
    %v256 = vld [vmem:[#allocation5 + $0x370] sm:$0xff]
    %v257 = vld [vmem:[#allocation5 + $0x378] sm:$0xff]
    %v258 = vld [vmem:[#allocation5 + $0x380] sm:$0xff]
    %v259 = vld [vmem:[#allocation5 + $0x388] sm:$0xff]
    %v260 = vld [vmem:[#allocation5 + $0x390] sm:$0xff]
    %v261 = vld [vmem:[#allocation5 + $0x398] sm:$0xff]
    %v262 = vld [vmem:[#allocation5 + $0x3a0] sm:$0xff]
    %v263 = vld [vmem:[#allocation5 + $0x3a8] sm:$0xff]
    %v264 = vld [vmem:[#allocation5 + $0x3b0] sm:$0xff]
    %v265 = vld [vmem:[#allocation5 + $0x3b8] sm:$0xff]
    %v266 = vld [vmem:[#allocation5 + $0x3c0] sm:$0xff]
    %v267 = vld [vmem:[#allocation5 + $0x3c8] sm:$0xff]
    %v268 = vld [vmem:[#allocation5 + $0x3d0] sm:$0xff]
    %v269 = vld [vmem:[#allocation5 + $0x3d8] sm:$0xff]
    %v270 = vld [vmem:[#allocation5 + $0x3e0] sm:$0xff]
    %v271 = vld [vmem:[#allocation5 + $0x3e8] sm:$0xff]
    %v272 = vld [vmem:[#allocation5 + $0x3f0] sm:$0xff]
    %v273 = vld [vmem:[#allocation5 + $0x3f8] sm:$0xff]
    %v274 = vld [vmem:[#allocation7] sm:$0xf]
    %v276 = vperm.slane %v274, 0
    %v277 = vperm.slane %v274, 1
    %v278 = vperm.slane %v274, 2
    %v279 = vperm.slane %v274, 3
    %v288 = vunpack.c.l.b16 %v142
    %v289 = vunpack.c.h.b16 %v142
    %v290 = vunpack.c.l.b16 %v143
    %v291 = vunpack.c.h.b16 %v143
    %v292 = vunpack.c.l.b16 %v144
    %v293 = vunpack.c.h.b16 %v144
    %v294 = vunpack.c.l.b16 %v145
    %v295 = vunpack.c.h.b16 %v145
    %v296 = vpack.c.b16 %v292, %v288
    %v297 = vpack.c.b16 %v293, %v289
    %v298 = vpack.c.b16 %v294, %v290
    %v299 = vpack.c.b16 %v295, %v291
    %v432 = vunpack.c.l.b16 %v146
    %v433 = vunpack.c.h.b16 %v146
    %v434 = vunpack.c.l.b16 %v147
    %v435 = vunpack.c.h.b16 %v147
    %v436 = vunpack.c.l.b16 %v148
    %v437 = vunpack.c.h.b16 %v148
    %v438 = vunpack.c.l.b16 %v149
    %v439 = vunpack.c.h.b16 %v149
    %v440 = vunpack.c.l.b16 %v150
    %v441 = vunpack.c.h.b16 %v150
    %v442 = vunpack.c.l.b16 %v151
    %v443 = vunpack.c.h.b16 %v151
    %v444 = vunpack.c.l.b16 %v152
    %v445 = vunpack.c.h.b16 %v152
    %v446 = vunpack.c.l.b16 %v153
    %v447 = vunpack.c.h.b16 %v153
    %v448 = vunpack.c.l.b16 %v154
    %v449 = vunpack.c.h.b16 %v154
    %v450 = vunpack.c.l.b16 %v155
    %v451 = vunpack.c.h.b16 %v155
    %v452 = vunpack.c.l.b16 %v156
    %v453 = vunpack.c.h.b16 %v156
    %v454 = vunpack.c.l.b16 %v157
    %v455 = vunpack.c.h.b16 %v157
    %v456 = vunpack.c.l.b16 %v158
    %v457 = vunpack.c.h.b16 %v158
    %v458 = vunpack.c.l.b16 %v159
    %v459 = vunpack.c.h.b16 %v159
    %v460 = vunpack.c.l.b16 %v160
    %v461 = vunpack.c.h.b16 %v160
    %v462 = vunpack.c.l.b16 %v161
    %v463 = vunpack.c.h.b16 %v161
    %v464 = vunpack.c.l.b16 %v162
    %v465 = vunpack.c.h.b16 %v162
    %v466 = vunpack.c.l.b16 %v163
    %v467 = vunpack.c.h.b16 %v163
    %v468 = vunpack.c.l.b16 %v164
    %v469 = vunpack.c.h.b16 %v164
    %v470 = vunpack.c.l.b16 %v165
    %v471 = vunpack.c.h.b16 %v165
    %v472 = vunpack.c.l.b16 %v166
    %v473 = vunpack.c.h.b16 %v166
    %v474 = vunpack.c.l.b16 %v167
    %v475 = vunpack.c.h.b16 %v167
    %v476 = vunpack.c.l.b16 %v168
    %v477 = vunpack.c.h.b16 %v168
    %v478 = vunpack.c.l.b16 %v169
    %v479 = vunpack.c.h.b16 %v169
    %v480 = vunpack.c.l.b16 %v170
    %v481 = vunpack.c.h.b16 %v170
    %v482 = vunpack.c.l.b16 %v171
    %v483 = vunpack.c.h.b16 %v171
    %v484 = vunpack.c.l.b16 %v172
    %v485 = vunpack.c.h.b16 %v172
    %v486 = vunpack.c.l.b16 %v173
    %v487 = vunpack.c.h.b16 %v173
    %v488 = vunpack.c.l.b16 %v174
    %v489 = vunpack.c.h.b16 %v174
    %v490 = vunpack.c.l.b16 %v175
    %v491 = vunpack.c.h.b16 %v175
    %v492 = vunpack.c.l.b16 %v176
    %v493 = vunpack.c.h.b16 %v176
    %v494 = vunpack.c.l.b16 %v177
    %v495 = vunpack.c.h.b16 %v177
    %v496 = vunpack.c.l.b16 %v178
    %v497 = vunpack.c.h.b16 %v178
    %v498 = vunpack.c.l.b16 %v179
    %v499 = vunpack.c.h.b16 %v179
    %v500 = vunpack.c.l.b16 %v180
    %v501 = vunpack.c.h.b16 %v180
    %v502 = vunpack.c.l.b16 %v181
    %v503 = vunpack.c.h.b16 %v181
    %v504 = vunpack.c.l.b16 %v182
    %v505 = vunpack.c.h.b16 %v182
    %v506 = vunpack.c.l.b16 %v183
    %v507 = vunpack.c.h.b16 %v183
    %v508 = vunpack.c.l.b16 %v184
    %v509 = vunpack.c.h.b16 %v184
    %v510 = vunpack.c.l.b16 %v185
    %v511 = vunpack.c.h.b16 %v185
    %v512 = vunpack.c.l.b16 %v186
    %v513 = vunpack.c.h.b16 %v186
    %v514 = vunpack.c.l.b16 %v187
    %v515 = vunpack.c.h.b16 %v187
    %v516 = vunpack.c.l.b16 %v188
    %v517 = vunpack.c.h.b16 %v188
    %v518 = vunpack.c.l.b16 %v189
    %v519 = vunpack.c.h.b16 %v189
    %v520 = vunpack.c.l.b16 %v190
    %v521 = vunpack.c.h.b16 %v190
    %v522 = vunpack.c.l.b16 %v191
    %v523 = vunpack.c.h.b16 %v191
    %v524 = vunpack.c.l.b16 %v192
    %v525 = vunpack.c.h.b16 %v192
    %v526 = vunpack.c.l.b16 %v193
    %v527 = vunpack.c.h.b16 %v193
    %v528 = vunpack.c.l.b16 %v194
    %v529 = vunpack.c.h.b16 %v194
    %v530 = vunpack.c.l.b16 %v195
    %v531 = vunpack.c.h.b16 %v195
    %v532 = vunpack.c.l.b16 %v196
    %v533 = vunpack.c.h.b16 %v196
    %v534 = vunpack.c.l.b16 %v197
    %v535 = vunpack.c.h.b16 %v197
    %v536 = vunpack.c.l.b16 %v198
    %v537 = vunpack.c.h.b16 %v198
    %v538 = vunpack.c.l.b16 %v199
    %v539 = vunpack.c.h.b16 %v199
    %v540 = vunpack.c.l.b16 %v200
    %v541 = vunpack.c.h.b16 %v200
    %v542 = vunpack.c.l.b16 %v201
    %v543 = vunpack.c.h.b16 %v201
    %v544 = vunpack.c.l.b16 %v202
    %v545 = vunpack.c.h.b16 %v202
    %v546 = vunpack.c.l.b16 %v203
    %v547 = vunpack.c.h.b16 %v203
    %v548 = vunpack.c.l.b16 %v204
    %v549 = vunpack.c.h.b16 %v204
    %v550 = vunpack.c.l.b16 %v205
    %v551 = vunpack.c.h.b16 %v205
    %v552 = vunpack.c.l.b16 %v206
    %v553 = vunpack.c.h.b16 %v206
    %v554 = vunpack.c.l.b16 %v207
    %v555 = vunpack.c.h.b16 %v207
    %v556 = vunpack.c.l.b16 %v208
    %v557 = vunpack.c.h.b16 %v208
    %v558 = vunpack.c.l.b16 %v209
    %v559 = vunpack.c.h.b16 %v209
    %v560 = vunpack.c.l.b16 %v210
    %v561 = vunpack.c.h.b16 %v210
    %v562 = vunpack.c.l.b16 %v211
    %v563 = vunpack.c.h.b16 %v211
    %v564 = vunpack.c.l.b16 %v212
    %v565 = vunpack.c.h.b16 %v212
    %v566 = vunpack.c.l.b16 %v213
    %v567 = vunpack.c.h.b16 %v213
    %v568 = vunpack.c.l.b16 %v214
    %v569 = vunpack.c.h.b16 %v214
    %v570 = vunpack.c.l.b16 %v215
    %v571 = vunpack.c.h.b16 %v215
    %v572 = vunpack.c.l.b16 %v216
    %v573 = vunpack.c.h.b16 %v216
    %v574 = vunpack.c.l.b16 %v217
    %v575 = vunpack.c.h.b16 %v217
    %v576 = vunpack.c.l.b16 %v218
    %v577 = vunpack.c.h.b16 %v218
    %v578 = vunpack.c.l.b16 %v219
    %v579 = vunpack.c.h.b16 %v219
    %v580 = vunpack.c.l.b16 %v220
    %v581 = vunpack.c.h.b16 %v220
    %v582 = vunpack.c.l.b16 %v221
    %v583 = vunpack.c.h.b16 %v221
    %v584 = vunpack.c.l.b16 %v222
    %v585 = vunpack.c.h.b16 %v222
    %v586 = vunpack.c.l.b16 %v223
    %v587 = vunpack.c.h.b16 %v223
    %v588 = vunpack.c.l.b16 %v224
    %v589 = vunpack.c.h.b16 %v224
    %v590 = vunpack.c.l.b16 %v225
    %v591 = vunpack.c.h.b16 %v225
    %v592 = vunpack.c.l.b16 %v226
    %v593 = vunpack.c.h.b16 %v226
    %v594 = vunpack.c.l.b16 %v227
    %v595 = vunpack.c.h.b16 %v227
    %v596 = vunpack.c.l.b16 %v228
    %v597 = vunpack.c.h.b16 %v228
    %v598 = vunpack.c.l.b16 %v229
    %v599 = vunpack.c.h.b16 %v229
    %v600 = vunpack.c.l.b16 %v230
    %v601 = vunpack.c.h.b16 %v230
    %v602 = vunpack.c.l.b16 %v231
    %v603 = vunpack.c.h.b16 %v231
    %v604 = vunpack.c.l.b16 %v232
    %v605 = vunpack.c.h.b16 %v232
    %v606 = vunpack.c.l.b16 %v233
    %v607 = vunpack.c.h.b16 %v233
    %v608 = vunpack.c.l.b16 %v234
    %v609 = vunpack.c.h.b16 %v234
    %v610 = vunpack.c.l.b16 %v235
    %v611 = vunpack.c.h.b16 %v235
    %v612 = vunpack.c.l.b16 %v236
    %v613 = vunpack.c.h.b16 %v236
    %v614 = vunpack.c.l.b16 %v237
    %v615 = vunpack.c.h.b16 %v237
    %v616 = vunpack.c.l.b16 %v238
    %v617 = vunpack.c.h.b16 %v238
    %v618 = vunpack.c.l.b16 %v239
    %v619 = vunpack.c.h.b16 %v239
    %v620 = vunpack.c.l.b16 %v240
    %v621 = vunpack.c.h.b16 %v240
    %v622 = vunpack.c.l.b16 %v241
    %v623 = vunpack.c.h.b16 %v241
    %v624 = vunpack.c.l.b16 %v242
    %v625 = vunpack.c.h.b16 %v242
    %v626 = vunpack.c.l.b16 %v243
    %v627 = vunpack.c.h.b16 %v243
    %v628 = vunpack.c.l.b16 %v244
    %v629 = vunpack.c.h.b16 %v244
    %v630 = vunpack.c.l.b16 %v245
    %v631 = vunpack.c.h.b16 %v245
    %v632 = vunpack.c.l.b16 %v246
    %v633 = vunpack.c.h.b16 %v246
    %v634 = vunpack.c.l.b16 %v247
    %v635 = vunpack.c.h.b16 %v247
    %v636 = vunpack.c.l.b16 %v248
    %v637 = vunpack.c.h.b16 %v248
    %v638 = vunpack.c.l.b16 %v249
    %v639 = vunpack.c.h.b16 %v249
    %v640 = vunpack.c.l.b16 %v250
    %v641 = vunpack.c.h.b16 %v250
    %v642 = vunpack.c.l.b16 %v251
    %v643 = vunpack.c.h.b16 %v251
    %v644 = vunpack.c.l.b16 %v252
    %v645 = vunpack.c.h.b16 %v252
    %v646 = vunpack.c.l.b16 %v253
    %v647 = vunpack.c.h.b16 %v253
    %v648 = vunpack.c.l.b16 %v254
    %v649 = vunpack.c.h.b16 %v254
    %v650 = vunpack.c.l.b16 %v255
    %v651 = vunpack.c.h.b16 %v255
    %v652 = vunpack.c.l.b16 %v256
    %v653 = vunpack.c.h.b16 %v256
    %v654 = vunpack.c.l.b16 %v257
    %v655 = vunpack.c.h.b16 %v257
    %v656 = vunpack.c.l.b16 %v258
    %v657 = vunpack.c.h.b16 %v258
    %v658 = vunpack.c.l.b16 %v259
    %v659 = vunpack.c.h.b16 %v259
    %v660 = vunpack.c.l.b16 %v260
    %v661 = vunpack.c.h.b16 %v260
    %v662 = vunpack.c.l.b16 %v261
    %v663 = vunpack.c.h.b16 %v261
    %v664 = vunpack.c.l.b16 %v262
    %v665 = vunpack.c.h.b16 %v262
    %v666 = vunpack.c.l.b16 %v263
    %v667 = vunpack.c.h.b16 %v263
    %v668 = vunpack.c.l.b16 %v264
    %v669 = vunpack.c.h.b16 %v264
    %v670 = vunpack.c.l.b16 %v265
    %v671 = vunpack.c.h.b16 %v265
    %v672 = vunpack.c.l.b16 %v266
    %v673 = vunpack.c.h.b16 %v266
    %v674 = vunpack.c.l.b16 %v267
    %v675 = vunpack.c.h.b16 %v267
    %v676 = vunpack.c.l.b16 %v268
    %v677 = vunpack.c.h.b16 %v268
    %v678 = vunpack.c.l.b16 %v269
    %v679 = vunpack.c.h.b16 %v269
    %v680 = vunpack.c.l.b16 %v270
    %v681 = vunpack.c.h.b16 %v270
    %v682 = vunpack.c.l.b16 %v271
    %v683 = vunpack.c.h.b16 %v271
    %v684 = vunpack.c.l.b16 %v272
    %v685 = vunpack.c.h.b16 %v272
    %v686 = vunpack.c.l.b16 %v273
    %v687 = vunpack.c.h.b16 %v273
    %v688 = vpack.c.b16 %v436, %v432
    %v689 = vpack.c.b16 %v437, %v433
    %v690 = vpack.c.b16 %v438, %v434
    %v691 = vpack.c.b16 %v439, %v435
    %v692 = vpack.c.b16 %v444, %v440
    %v693 = vpack.c.b16 %v445, %v441
    %v694 = vpack.c.b16 %v446, %v442
    %v695 = vpack.c.b16 %v447, %v443
    %v696 = vpack.c.b16 %v452, %v448
    %v697 = vpack.c.b16 %v453, %v449
    %v698 = vpack.c.b16 %v454, %v450
    %v699 = vpack.c.b16 %v455, %v451
    %v700 = vpack.c.b16 %v460, %v456
    %v701 = vpack.c.b16 %v461, %v457
    %v702 = vpack.c.b16 %v462, %v458
    %v703 = vpack.c.b16 %v463, %v459
    %v704 = vpack.c.b16 %v468, %v464
    %v705 = vpack.c.b16 %v469, %v465
    %v706 = vpack.c.b16 %v470, %v466
    %v707 = vpack.c.b16 %v471, %v467
    %v708 = vpack.c.b16 %v476, %v472
    %v709 = vpack.c.b16 %v477, %v473
    %v710 = vpack.c.b16 %v478, %v474
    %v711 = vpack.c.b16 %v479, %v475
    %v712 = vpack.c.b16 %v484, %v480
    %v713 = vpack.c.b16 %v485, %v481
    %v714 = vpack.c.b16 %v486, %v482
    %v715 = vpack.c.b16 %v487, %v483
    %v716 = vpack.c.b16 %v492, %v488
    %v717 = vpack.c.b16 %v493, %v489
    %v718 = vpack.c.b16 %v494, %v490
    %v719 = vpack.c.b16 %v495, %v491
    %v720 = vpack.c.b16 %v500, %v496
    %v721 = vpack.c.b16 %v501, %v497
    %v722 = vpack.c.b16 %v502, %v498
    %v723 = vpack.c.b16 %v503, %v499
    %v724 = vpack.c.b16 %v508, %v504
    %v725 = vpack.c.b16 %v509, %v505
    %v726 = vpack.c.b16 %v510, %v506
    %v727 = vpack.c.b16 %v511, %v507
    %v728 = vpack.c.b16 %v516, %v512
    %v729 = vpack.c.b16 %v517, %v513
    %v730 = vpack.c.b16 %v518, %v514
    %v731 = vpack.c.b16 %v519, %v515
    %v732 = vpack.c.b16 %v524, %v520
    %v733 = vpack.c.b16 %v525, %v521
    %v734 = vpack.c.b16 %v526, %v522
    %v735 = vpack.c.b16 %v527, %v523
    %v736 = vpack.c.b16 %v532, %v528
    %v737 = vpack.c.b16 %v533, %v529
    %v738 = vpack.c.b16 %v534, %v530
    %v739 = vpack.c.b16 %v535, %v531
    %v740 = vpack.c.b16 %v540, %v536
    %v741 = vpack.c.b16 %v541, %v537
    %v742 = vpack.c.b16 %v542, %v538
    %v743 = vpack.c.b16 %v543, %v539
    %v744 = vpack.c.b16 %v548, %v544
    %v745 = vpack.c.b16 %v549, %v545
    %v746 = vpack.c.b16 %v550, %v546
    %v747 = vpack.c.b16 %v551, %v547
    %v748 = vpack.c.b16 %v556, %v552
    %v749 = vpack.c.b16 %v557, %v553
    %v750 = vpack.c.b16 %v558, %v554
    %v751 = vpack.c.b16 %v559, %v555
    %v752 = vpack.c.b16 %v564, %v560
    %v753 = vpack.c.b16 %v565, %v561
    %v754 = vpack.c.b16 %v566, %v562
    %v755 = vpack.c.b16 %v567, %v563
    %v756 = vpack.c.b16 %v572, %v568
    %v757 = vpack.c.b16 %v573, %v569
    %v758 = vpack.c.b16 %v574, %v570
    %v759 = vpack.c.b16 %v575, %v571
    %v760 = vpack.c.b16 %v580, %v576
    %v761 = vpack.c.b16 %v581, %v577
    %v762 = vpack.c.b16 %v582, %v578
    %v763 = vpack.c.b16 %v583, %v579
    %v764 = vpack.c.b16 %v588, %v584
    %v765 = vpack.c.b16 %v589, %v585
    %v766 = vpack.c.b16 %v590, %v586
    %v767 = vpack.c.b16 %v591, %v587
    %v768 = vpack.c.b16 %v596, %v592
    %v769 = vpack.c.b16 %v597, %v593
    %v770 = vpack.c.b16 %v598, %v594
    %v771 = vpack.c.b16 %v599, %v595
    %v772 = vpack.c.b16 %v604, %v600
    %v773 = vpack.c.b16 %v605, %v601
    %v774 = vpack.c.b16 %v606, %v602
    %v775 = vpack.c.b16 %v607, %v603
    %v776 = vpack.c.b16 %v612, %v608
    %v777 = vpack.c.b16 %v613, %v609
    %v778 = vpack.c.b16 %v614, %v610
    %v779 = vpack.c.b16 %v615, %v611
    %v780 = vpack.c.b16 %v620, %v616
    %v781 = vpack.c.b16 %v621, %v617
    %v782 = vpack.c.b16 %v622, %v618
    %v783 = vpack.c.b16 %v623, %v619
    %v784 = vpack.c.b16 %v628, %v624
    %v785 = vpack.c.b16 %v629, %v625
    %v786 = vpack.c.b16 %v630, %v626
    %v787 = vpack.c.b16 %v631, %v627
    %v788 = vpack.c.b16 %v636, %v632
    %v789 = vpack.c.b16 %v637, %v633
    %v790 = vpack.c.b16 %v638, %v634
    %v791 = vpack.c.b16 %v639, %v635
    %v792 = vpack.c.b16 %v644, %v640
    %v793 = vpack.c.b16 %v645, %v641
    %v794 = vpack.c.b16 %v646, %v642
    %v795 = vpack.c.b16 %v647, %v643
    %v796 = vpack.c.b16 %v652, %v648
    %v797 = vpack.c.b16 %v653, %v649
    %v798 = vpack.c.b16 %v654, %v650
    %v799 = vpack.c.b16 %v655, %v651
    %v800 = vpack.c.b16 %v660, %v656
    %v801 = vpack.c.b16 %v661, %v657
    %v802 = vpack.c.b16 %v662, %v658
    %v803 = vpack.c.b16 %v663, %v659
    %v804 = vpack.c.b16 %v668, %v664
    %v805 = vpack.c.b16 %v669, %v665
    %v806 = vpack.c.b16 %v670, %v666
    %v807 = vpack.c.b16 %v671, %v667
    %v808 = vpack.c.b16 %v676, %v672
    %v809 = vpack.c.b16 %v677, %v673
    %v810 = vpack.c.b16 %v678, %v674
    %v811 = vpack.c.b16 %v679, %v675
    %v812 = vpack.c.b16 %v684, %v680
    %v813 = vpack.c.b16 %v685, %v681
    %v814 = vpack.c.b16 %v686, %v682
    %v815 = vpack.c.b16 %v687, %v683
    %944 = vmatpush.bf16.msra.mxu0 %v716
    %945 = vmatpush.bf16.msra.mxu0 %v712
    %946 = vmatpush.bf16.msra.mxu0 %v708
    %947 = vmatpush.bf16.msra.mxu0 %v704
    %948 = vmatpush.bf16.msra.mxu0 %v700
    %949 = vmatpush.bf16.msra.mxu0 %v696
    %950 = vmatpush.bf16.msra.mxu0 %v692
    %951 = vmatpush.bf16.msra.mxu0 %v688
    %952 = vmatmul.bf16.gmra.mxu0 %v296
    %v953 = vpop.f32.mrf.mxu0
    %v954 = vadd.f32 %v276, %v953
    %v955 = vpop.f32.mrf.mxu0
    %v956 = vadd.f32 %v276, %v955
    %957 = vdwg.mxu0
    %958 = vmatpush.bf16.msra.mxu0 %v748
    %959 = vmatpush.bf16.msra.mxu0 %v744
    %960 = vmatpush.bf16.msra.mxu0 %v740
    %961 = vmatpush.bf16.msra.mxu0 %v736
    %962 = vmatpush.bf16.msra.mxu0 %v732
    %963 = vmatpush.bf16.msra.mxu0 %v728
    %964 = vmatpush.bf16.msra.mxu0 %v724
    %965 = vmatpush.bf16.msra.mxu0 %v720
    %966 = vmatmul.bf16.gmra.mxu0 %v297
    %v967 = vpop.f32.mrf.mxu0
    %v968 = vadd.f32 %v954, %v967
    %v969 = vpop.f32.mrf.mxu0
    %v970 = vadd.f32 %v956, %v969
    %971 = vdwg.mxu0
    %972 = vmatpush.bf16.msra.mxu0 %v780
    %973 = vmatpush.bf16.msra.mxu0 %v776
    %974 = vmatpush.bf16.msra.mxu0 %v772
    %975 = vmatpush.bf16.msra.mxu0 %v768
    %976 = vmatpush.bf16.msra.mxu0 %v764
    %977 = vmatpush.bf16.msra.mxu0 %v760
    %978 = vmatpush.bf16.msra.mxu0 %v756
    %979 = vmatpush.bf16.msra.mxu0 %v752
    %980 = vmatmul.bf16.gmra.mxu0 %v298
    %v981 = vpop.f32.mrf.mxu0
    %v982 = vadd.f32 %v968, %v981
    %v983 = vpop.f32.mrf.mxu0
    %v984 = vadd.f32 %v970, %v983
    %985 = vdwg.mxu0
    %986 = vmatpush.bf16.msra.mxu0 %v812
    %987 = vmatpush.bf16.msra.mxu0 %v808
    %988 = vmatpush.bf16.msra.mxu0 %v804
    %989 = vmatpush.bf16.msra.mxu0 %v800
    %990 = vmatpush.bf16.msra.mxu0 %v796
    %991 = vmatpush.bf16.msra.mxu0 %v792
    %992 = vmatpush.bf16.msra.mxu0 %v788
    %993 = vmatpush.bf16.msra.mxu0 %v784
    %994 = vmatmul.bf16.gmra.mxu0 %v299
    %v995 = vpop.f32.mrf.mxu0
    %v996 = vadd.f32 %v982, %v995
    %v997 = vpop.f32.mrf.mxu0
    %v998 = vadd.f32 %v984, %v997
    %999 = vdwg.mxu0
    %1000 = vmatpush.bf16.msra.mxu0 %v717
    %1001 = vmatpush.bf16.msra.mxu0 %v713
    %1002 = vmatpush.bf16.msra.mxu0 %v709
    %1003 = vmatpush.bf16.msra.mxu0 %v705
    %1004 = vmatpush.bf16.msra.mxu0 %v701
    %1005 = vmatpush.bf16.msra.mxu0 %v697
    %1006 = vmatpush.bf16.msra.mxu0 %v693
    %1007 = vmatpush.bf16.msra.mxu0 %v689
    %1008 = vmatmul.bf16.gmra.mxu0 %v296
    %v1009 = vpop.f32.mrf.mxu0
    %v1010 = vadd.f32 %v277, %v1009
    %v1011 = vpop.f32.mrf.mxu0
    %v1012 = vadd.f32 %v277, %v1011
    %1013 = vdwg.mxu0
    %1014 = vmatpush.bf16.msra.mxu0 %v749
    %1015 = vmatpush.bf16.msra.mxu0 %v745
    %1016 = vmatpush.bf16.msra.mxu0 %v741
    %1017 = vmatpush.bf16.msra.mxu0 %v737
    %1018 = vmatpush.bf16.msra.mxu0 %v733
    %1019 = vmatpush.bf16.msra.mxu0 %v729
    %1020 = vmatpush.bf16.msra.mxu0 %v725
    %1021 = vmatpush.bf16.msra.mxu0 %v721
    %1022 = vmatmul.bf16.gmra.mxu0 %v297
    %v1023 = vpop.f32.mrf.mxu0
    %v1024 = vadd.f32 %v1010, %v1023
    %v1025 = vpop.f32.mrf.mxu0
    %v1026 = vadd.f32 %v1012, %v1025
    %1027 = vdwg.mxu0
    %1028 = vmatpush.bf16.msra.mxu0 %v781
    %1029 = vmatpush.bf16.msra.mxu0 %v777
    %1030 = vmatpush.bf16.msra.mxu0 %v773
    %1031 = vmatpush.bf16.msra.mxu0 %v769
    %1032 = vmatpush.bf16.msra.mxu0 %v765
    %1033 = vmatpush.bf16.msra.mxu0 %v761
    %1034 = vmatpush.bf16.msra.mxu0 %v757
    %1035 = vmatpush.bf16.msra.mxu0 %v753
    %1036 = vmatmul.bf16.gmra.mxu0 %v298
    %v1037 = vpop.f32.mrf.mxu0
    %v1038 = vadd.f32 %v1024, %v1037
    %v1039 = vpop.f32.mrf.mxu0
    %v1040 = vadd.f32 %v1026, %v1039
    %1041 = vdwg.mxu0
    %1042 = vmatpush.bf16.msra.mxu0 %v813
    %1043 = vmatpush.bf16.msra.mxu0 %v809
    %1044 = vmatpush.bf16.msra.mxu0 %v805
    %1045 = vmatpush.bf16.msra.mxu0 %v801
    %1046 = vmatpush.bf16.msra.mxu0 %v797
    %1047 = vmatpush.bf16.msra.mxu0 %v793
    %1048 = vmatpush.bf16.msra.mxu0 %v789
    %1049 = vmatpush.bf16.msra.mxu0 %v785
    %1050 = vmatmul.bf16.gmra.mxu0 %v299
    %v1051 = vpop.f32.mrf.mxu0
    %v1052 = vadd.f32 %v1038, %v1051
    %v1053 = vpop.f32.mrf.mxu0
    %v1054 = vadd.f32 %v1040, %v1053
    %1055 = vdwg.mxu0
    %1056 = vmatpush.bf16.msra.mxu0 %v718
    %1057 = vmatpush.bf16.msra.mxu0 %v714
    %1058 = vmatpush.bf16.msra.mxu0 %v710
    %1059 = vmatpush.bf16.msra.mxu0 %v706
    %1060 = vmatpush.bf16.msra.mxu0 %v702
    %1061 = vmatpush.bf16.msra.mxu0 %v698
    %1062 = vmatpush.bf16.msra.mxu0 %v694
    %1063 = vmatpush.bf16.msra.mxu0 %v690
    %1064 = vmatmul.bf16.gmra.mxu0 %v296
    %v1065 = vpop.f32.mrf.mxu0
    %v1066 = vadd.f32 %v278, %v1065
    %v1067 = vpop.f32.mrf.mxu0
    %v1068 = vadd.f32 %v278, %v1067
    %1069 = vdwg.mxu0
    %1070 = vmatpush.bf16.msra.mxu0 %v750
    %1071 = vmatpush.bf16.msra.mxu0 %v746
    %1072 = vmatpush.bf16.msra.mxu0 %v742
    %1073 = vmatpush.bf16.msra.mxu0 %v738
    %1074 = vmatpush.bf16.msra.mxu0 %v734
    %1075 = vmatpush.bf16.msra.mxu0 %v730
    %1076 = vmatpush.bf16.msra.mxu0 %v726
    %1077 = vmatpush.bf16.msra.mxu0 %v722
    %1078 = vmatmul.bf16.gmra.mxu0 %v297
    %v1079 = vpop.f32.mrf.mxu0
    %v1080 = vadd.f32 %v1066, %v1079
    %v1081 = vpop.f32.mrf.mxu0
    %v1082 = vadd.f32 %v1068, %v1081
    %1083 = vdwg.mxu0
    %1084 = vmatpush.bf16.msra.mxu0 %v782
    %1085 = vmatpush.bf16.msra.mxu0 %v778
    %1086 = vmatpush.bf16.msra.mxu0 %v774
    %1087 = vmatpush.bf16.msra.mxu0 %v770
    %1088 = vmatpush.bf16.msra.mxu0 %v766
    %1089 = vmatpush.bf16.msra.mxu0 %v762
    %1090 = vmatpush.bf16.msra.mxu0 %v758
    %1091 = vmatpush.bf16.msra.mxu0 %v754
    %1092 = vmatmul.bf16.gmra.mxu0 %v298
    %v1093 = vpop.f32.mrf.mxu0
    %v1094 = vadd.f32 %v1080, %v1093
    %v1095 = vpop.f32.mrf.mxu0
    %v1096 = vadd.f32 %v1082, %v1095
    %1097 = vdwg.mxu0
    %1098 = vmatpush.bf16.msra.mxu0 %v814
    %1099 = vmatpush.bf16.msra.mxu0 %v810
    %1100 = vmatpush.bf16.msra.mxu0 %v806
    %1101 = vmatpush.bf16.msra.mxu0 %v802
    %1102 = vmatpush.bf16.msra.mxu0 %v798
    %1103 = vmatpush.bf16.msra.mxu0 %v794
    %1104 = vmatpush.bf16.msra.mxu0 %v790
    %1105 = vmatpush.bf16.msra.mxu0 %v786
    %1106 = vmatmul.bf16.gmra.mxu0 %v299
    %v1107 = vpop.f32.mrf.mxu0
    %v1108 = vadd.f32 %v1094, %v1107
    %v1109 = vpop.f32.mrf.mxu0
    %v1110 = vadd.f32 %v1096, %v1109
    %1111 = vdwg.mxu0
    %1112 = vmatpush.bf16.msra.mxu0 %v719
    %1113 = vmatpush.bf16.msra.mxu0 %v715
    %1114 = vmatpush.bf16.msra.mxu0 %v711
    %1115 = vmatpush.bf16.msra.mxu0 %v707
    %1116 = vmatpush.bf16.msra.mxu0 %v703
    %1117 = vmatpush.bf16.msra.mxu0 %v699
    %1118 = vmatpush.bf16.msra.mxu0 %v695
    %1119 = vmatpush.bf16.msra.mxu0 %v691
    %1120 = vmatmul.bf16.gmra.mxu0 %v296
    %v1121 = vpop.f32.mrf.mxu0
    %v1122 = vadd.f32 %v279, %v1121
    %v1123 = vpop.f32.mrf.mxu0
    %v1124 = vadd.f32 %v279, %v1123
    %1125 = vdwg.mxu0
    %1126 = vmatpush.bf16.msra.mxu0 %v751
    %1127 = vmatpush.bf16.msra.mxu0 %v747
    %1128 = vmatpush.bf16.msra.mxu0 %v743
    %1129 = vmatpush.bf16.msra.mxu0 %v739
    %1130 = vmatpush.bf16.msra.mxu0 %v735
    %1131 = vmatpush.bf16.msra.mxu0 %v731
    %1132 = vmatpush.bf16.msra.mxu0 %v727
    %1133 = vmatpush.bf16.msra.mxu0 %v723
    %1134 = vmatmul.bf16.gmra.mxu0 %v297
    %v1135 = vpop.f32.mrf.mxu0
    %v1136 = vadd.f32 %v1122, %v1135
    %v1137 = vpop.f32.mrf.mxu0
    %v1138 = vadd.f32 %v1124, %v1137
    %1139 = vdwg.mxu0
    %1140 = vmatpush.bf16.msra.mxu0 %v783
    %1141 = vmatpush.bf16.msra.mxu0 %v779
    %1142 = vmatpush.bf16.msra.mxu0 %v775
    %1143 = vmatpush.bf16.msra.mxu0 %v771
    %1144 = vmatpush.bf16.msra.mxu0 %v767
    %1145 = vmatpush.bf16.msra.mxu0 %v763
    %1146 = vmatpush.bf16.msra.mxu0 %v759
    %1147 = vmatpush.bf16.msra.mxu0 %v755
    %1148 = vmatmul.bf16.gmra.mxu0 %v298
    %v1149 = vpop.f32.mrf.mxu0
    %v1150 = vadd.f32 %v1136, %v1149
    %v1151 = vpop.f32.mrf.mxu0
    %v1152 = vadd.f32 %v1138, %v1151
    %1153 = vdwg.mxu0
    %1154 = vmatpush.bf16.msra.mxu0 %v815
    %1155 = vmatpush.bf16.msra.mxu0 %v811
    %1156 = vmatpush.bf16.msra.mxu0 %v807
    %1157 = vmatpush.bf16.msra.mxu0 %v803
    %1158 = vmatpush.bf16.msra.mxu0 %v799
    %1159 = vmatpush.bf16.msra.mxu0 %v795
    %1160 = vmatpush.bf16.msra.mxu0 %v791
    %1161 = vmatpush.bf16.msra.mxu0 %v787
    %1162 = vmatmul.bf16.gmra.mxu0 %v299
    %v1163 = vpop.f32.mrf.mxu0
    %v1164 = vadd.f32 %v1150, %v1163
    %v1165 = vpop.f32.mrf.mxu0
    %v1166 = vadd.f32 %v1152, %v1165
    %1167 = vdwg.mxu0
    %v1168 = vld [vmem:[#allocation8] sm:$0xf]
    %v1169 = vld [vmem:[#allocation10] sm:$0xf]
    %v1170 = vadd.f32 %v996, %v1052
    %v1171 = vadd.f32 %v1170, %v1108
    %v1172 = vadd.f32 %v1171, %v1164
    %1173 = vadd.xlane.f32.xlu0 %v1172
    %v1174 = vpop.xlane.xlu0 %1173
    %v1175 = vadd.f32 %v998, %v1054
    %v1176 = vadd.f32 %v1175, %v1110
    %v1177 = vadd.f32 %v1176, %v1166
    %1178 = vadd.xlane.f32.xlu0 %v1177
    %v1179 = vpop.xlane.xlu0 %1178
    %v1180 = vrcp.pop 512.0
    %v1181 = vmul.f32 512.0, %v1180
    %v1182 = vsub.f32 1.0, %v1181
    %v1183 = vmul.f32 %v1180, %v1182
    %v1184 = vadd.f32 %v1180, %v1183
    %vm1185 = vweird.f32 %v1180
    %v1186 = vsel %vm1185, %v1180, %v1184
    %v1187 = vmul.f32 %v1174, %v1186
    %v1188 = vmul.f32 %v1179, %v1186
    %v1189 = vsub.f32 %v996, %v1187
    %v1190 = vsub.f32 %v1052, %v1187
    %v1191 = vsub.f32 %v1108, %v1187
    %v1192 = vsub.f32 %v1164, %v1187
    %v1193 = vsub.f32 %v998, %v1188
    %v1194 = vsub.f32 %v1054, %v1188
    %v1195 = vsub.f32 %v1110, %v1188
    %v1196 = vsub.f32 %v1166, %v1188
    %v1197 = vmul.f32 %v1189, %v1189
    %v1198 = vmul.f32 %v1190, %v1190
    %v1199 = vmul.f32 %v1191, %v1191
    %v1200 = vmul.f32 %v1192, %v1192
    %v1201 = vmul.f32 %v1193, %v1193
    %v1202 = vmul.f32 %v1194, %v1194
    %v1203 = vmul.f32 %v1195, %v1195
    %v1204 = vmul.f32 %v1196, %v1196
    %v1205 = vadd.f32 %v1197, %v1198
    %v1206 = vadd.f32 %v1205, %v1199
    %v1207 = vadd.f32 %v1206, %v1200
    %1208 = vadd.xlane.f32.xlu0 %v1207
    %v1209 = vpop.xlane.xlu0 %1208
    %v1210 = vadd.f32 %v1201, %v1202
    %v1211 = vadd.f32 %v1210, %v1203
    %v1212 = vadd.f32 %v1211, %v1204
    %1213 = vadd.xlane.f32.xlu0 %v1212
    %v1214 = vpop.xlane.xlu0 %1213
    %v1215 = vmul.f32 %v1209, %v1186
    %v1216 = vmul.f32 %v1214, %v1186
    %v1217 = vadd.f32 %v1215, 1e-05
    %v1218 = vadd.f32 %v1216, 1e-05
    %v1219 = vrsqrt.pop %v1217
    %v1220 = vmul.f32 %v1219, %v1217
    %v1221 = vmul.f32 %v1220, %v1219
    %v1222 = vmul.f32 0.5, %v1221
    %v1223 = vsub.f32 1.5, %v1222
    %v1224 = vmul.f32 %v1219, %v1223
    %vm1225 = vweird.f32 %v1217
    %vm1226 = vweird.f32 %v1219
    %vm1227 = vmor %vm1225, %vm1226
    %v1228 = vsel %vm1227, %v1219, %v1224
    %v1229 = vrsqrt.pop %v1218
    %v1230 = vmul.f32 %v1229, %v1218
    %v1231 = vmul.f32 %v1230, %v1229
    %v1232 = vmul.f32 0.5, %v1231
    %v1233 = vsub.f32 1.5, %v1232
    %v1234 = vmul.f32 %v1229, %v1233
    %vm1235 = vweird.f32 %v1218
    %vm1236 = vweird.f32 %v1229
    %vm1237 = vmor %vm1235, %vm1236
    %v1238 = vsel %vm1237, %v1229, %v1234
    %v1239 = vmul.f32 %v1189, %v1228
    %v1240 = vmul.f32 %v1190, %v1228
    %v1241 = vmul.f32 %v1191, %v1228
    %v1242 = vmul.f32 %v1192, %v1228
    %v1243 = vmul.f32 %v1193, %v1238
    %v1244 = vmul.f32 %v1194, %v1238
    %v1245 = vmul.f32 %v1195, %v1238
    %v1246 = vmul.f32 %v1196, %v1238
    %v1248 = vperm.slane %v1168, 0
    %v1249 = vperm.slane %v1168, 1
    %v1250 = vperm.slane %v1168, 2
    %v1251 = vperm.slane %v1168, 3
    %v1256 = vmul.f32 %v1239, %v1248
    %v1257 = vmul.f32 %v1240, %v1249
    %v1258 = vmul.f32 %v1241, %v1250
    %v1259 = vmul.f32 %v1242, %v1251
    %v1260 = vmul.f32 %v1243, %v1248
    %v1261 = vmul.f32 %v1244, %v1249
    %v1262 = vmul.f32 %v1245, %v1250
    %v1263 = vmul.f32 %v1246, %v1251
    %v1265 = vperm.slane %v1169, 0
    %v1266 = vperm.slane %v1169, 1
    %v1267 = vperm.slane %v1169, 2
    %v1268 = vperm.slane %v1169, 3
    %v1273 = vadd.f32 %v1256, %v1265
    %v1274 = vadd.f32 %v1257, %v1266
    %v1275 = vadd.f32 %v1258, %v1267
    %v1276 = vadd.f32 %v1259, %v1268
    %v1277 = vadd.f32 %v1260, %v1265
    %v1278 = vadd.f32 %v1261, %v1266
    %v1279 = vadd.f32 %v1262, %v1267
    %v1280 = vadd.f32 %v1263, %v1268
    %v1281 = vmax.f32 %v1273, 0.0
    %v1282 = vmax.f32 %v1274, 0.0
    %v1283 = vmax.f32 %v1275, 0.0
    %v1284 = vmax.f32 %v1276, 0.0
    %v1285 = vmax.f32 %v1277, 0.0
    %v1286 = vmax.f32 %v1278, 0.0
    %v1287 = vmax.f32 %v1279, 0.0
    %v1288 = vmax.f32 %v1280, 0.0
    %v1289 = vpack.c.bf16 %v1285, %v1281
    %v1290 = vpack.c.bf16 %v1286, %v1282
    %v1291 = vpack.c.bf16 %v1287, %v1283
    %v1292 = vpack.c.bf16 %v1288, %v1284
    %v1293 = vld [vmem:[#allocation11] sm:$0xf]
    %v1294 = vld [vmem:[#allocation11 + $0x4] sm:$0xf]
    %v1295 = vld [vmem:[#allocation11 + $0x8] sm:$0xf]
    %v1296 = vld [vmem:[#allocation11 + $0xc] sm:$0xf]
    %v1297 = vld [vmem:[#allocation11 + $0x10] sm:$0xf]
    %v1298 = vld [vmem:[#allocation11 + $0x14] sm:$0xf]
    %v1299 = vld [vmem:[#allocation11 + $0x18] sm:$0xf]
    %v1300 = vld [vmem:[#allocation11 + $0x1c] sm:$0xf]
    %v1301 = vld [vmem:[#allocation11 + $0x20] sm:$0xf]
    %v1302 = vld [vmem:[#allocation11 + $0x24] sm:$0xf]
    %v1303 = vld [vmem:[#allocation11 + $0x28] sm:$0xf]
    %v1304 = vld [vmem:[#allocation11 + $0x2c] sm:$0xf]
    %v1305 = vld [vmem:[#allocation11 + $0x30] sm:$0xf]
    %v1306 = vld [vmem:[#allocation11 + $0x34] sm:$0xf]
    %v1307 = vld [vmem:[#allocation11 + $0x38] sm:$0xf]
    %v1308 = vld [vmem:[#allocation11 + $0x3c] sm:$0xf]
    %v1309 = vld [vmem:[#allocation11 + $0x40] sm:$0xf]
    %v1310 = vld [vmem:[#allocation11 + $0x44] sm:$0xf]
    %v1311 = vld [vmem:[#allocation11 + $0x48] sm:$0xf]
    %v1312 = vld [vmem:[#allocation11 + $0x4c] sm:$0xf]
    %v1313 = vld [vmem:[#allocation11 + $0x50] sm:$0xf]
    %v1314 = vld [vmem:[#allocation11 + $0x54] sm:$0xf]
    %v1315 = vld [vmem:[#allocation11 + $0x58] sm:$0xf]
    %v1316 = vld [vmem:[#allocation11 + $0x5c] sm:$0xf]
    %v1317 = vld [vmem:[#allocation11 + $0x60] sm:$0xf]
    %v1318 = vld [vmem:[#allocation11 + $0x64] sm:$0xf]
    %v1319 = vld [vmem:[#allocation11 + $0x68] sm:$0xf]
    %v1320 = vld [vmem:[#allocation11 + $0x6c] sm:$0xf]
    %v1321 = vld [vmem:[#allocation11 + $0x70] sm:$0xf]
    %v1322 = vld [vmem:[#allocation11 + $0x74] sm:$0xf]
    %v1323 = vld [vmem:[#allocation11 + $0x78] sm:$0xf]
    %v1324 = vld [vmem:[#allocation11 + $0x7c] sm:$0xf]
    %v1325 = vld [vmem:[#allocation11 + $0x80] sm:$0xf]
    %v1326 = vld [vmem:[#allocation11 + $0x84] sm:$0xf]
    %v1327 = vld [vmem:[#allocation11 + $0x88] sm:$0xf]
    %v1328 = vld [vmem:[#allocation11 + $0x8c] sm:$0xf]
    %v1329 = vld [vmem:[#allocation11 + $0x90] sm:$0xf]
    %v1330 = vld [vmem:[#allocation11 + $0x94] sm:$0xf]
    %v1331 = vld [vmem:[#allocation11 + $0x98] sm:$0xf]
    %v1332 = vld [vmem:[#allocation11 + $0x9c] sm:$0xf]
    %v1333 = vld [vmem:[#allocation11 + $0xa0] sm:$0xf]
    %v1334 = vld [vmem:[#allocation11 + $0xa4] sm:$0xf]
    %v1335 = vld [vmem:[#allocation11 + $0xa8] sm:$0xf]
    %v1336 = vld [vmem:[#allocation11 + $0xac] sm:$0xf]
    %v1337 = vld [vmem:[#allocation11 + $0xb0] sm:$0xf]
    %v1338 = vld [vmem:[#allocation11 + $0xb4] sm:$0xf]
    %v1339 = vld [vmem:[#allocation11 + $0xb8] sm:$0xf]
    %v1340 = vld [vmem:[#allocation11 + $0xbc] sm:$0xf]
    %v1341 = vld [vmem:[#allocation11 + $0xc0] sm:$0xf]
    %v1342 = vld [vmem:[#allocation11 + $0xc4] sm:$0xf]
    %v1343 = vld [vmem:[#allocation11 + $0xc8] sm:$0xf]
    %v1344 = vld [vmem:[#allocation11 + $0xcc] sm:$0xf]
    %v1345 = vld [vmem:[#allocation11 + $0xd0] sm:$0xf]
    %v1346 = vld [vmem:[#allocation11 + $0xd4] sm:$0xf]
    %v1347 = vld [vmem:[#allocation11 + $0xd8] sm:$0xf]
    %v1348 = vld [vmem:[#allocation11 + $0xdc] sm:$0xf]
    %v1349 = vld [vmem:[#allocation11 + $0xe0] sm:$0xf]
    %v1350 = vld [vmem:[#allocation11 + $0xe4] sm:$0xf]
    %v1351 = vld [vmem:[#allocation11 + $0xe8] sm:$0xf]
    %v1352 = vld [vmem:[#allocation11 + $0xec] sm:$0xf]
    %v1353 = vld [vmem:[#allocation11 + $0xf0] sm:$0xf]
    %v1354 = vld [vmem:[#allocation11 + $0xf4] sm:$0xf]
    %v1355 = vld [vmem:[#allocation11 + $0xf8] sm:$0xf]
    %v1356 = vld [vmem:[#allocation11 + $0xfc] sm:$0xf]
    %v1357 = vld [vmem:[%s6] sm:$0x1]
    %v1359 = vperm.slane %v1357, 0
    %v1425 = vunpack.c.l.b16 %v1293
    %v1426 = vunpack.c.l.b16 %v1294
    %v1427 = vunpack.c.l.b16 %v1295
    %v1428 = vunpack.c.l.b16 %v1296
    %v1429 = vunpack.c.l.b16 %v1297
    %v1430 = vunpack.c.l.b16 %v1298
    %v1431 = vunpack.c.l.b16 %v1299
    %v1432 = vunpack.c.l.b16 %v1300
    %v1433 = vunpack.c.l.b16 %v1301
    %v1434 = vunpack.c.l.b16 %v1302
    %v1435 = vunpack.c.l.b16 %v1303
    %v1436 = vunpack.c.l.b16 %v1304
    %v1437 = vunpack.c.l.b16 %v1305
    %v1438 = vunpack.c.l.b16 %v1306
    %v1439 = vunpack.c.l.b16 %v1307
    %v1440 = vunpack.c.l.b16 %v1308
    %v1441 = vunpack.c.l.b16 %v1309
    %v1442 = vunpack.c.l.b16 %v1310
    %v1443 = vunpack.c.l.b16 %v1311
    %v1444 = vunpack.c.l.b16 %v1312
    %v1445 = vunpack.c.l.b16 %v1313
    %v1446 = vunpack.c.l.b16 %v1314
    %v1447 = vunpack.c.l.b16 %v1315
    %v1448 = vunpack.c.l.b16 %v1316
    %v1449 = vunpack.c.l.b16 %v1317
    %v1450 = vunpack.c.l.b16 %v1318
    %v1451 = vunpack.c.l.b16 %v1319
    %v1452 = vunpack.c.l.b16 %v1320
    %v1453 = vunpack.c.l.b16 %v1321
    %v1454 = vunpack.c.l.b16 %v1322
    %v1455 = vunpack.c.l.b16 %v1323
    %v1456 = vunpack.c.l.b16 %v1324
    %v1457 = vunpack.c.l.b16 %v1325
    %v1458 = vunpack.c.l.b16 %v1326
    %v1459 = vunpack.c.l.b16 %v1327
    %v1460 = vunpack.c.l.b16 %v1328
    %v1461 = vunpack.c.l.b16 %v1329
    %v1462 = vunpack.c.l.b16 %v1330
    %v1463 = vunpack.c.l.b16 %v1331
    %v1464 = vunpack.c.l.b16 %v1332
    %v1465 = vunpack.c.l.b16 %v1333
    %v1466 = vunpack.c.l.b16 %v1334
    %v1467 = vunpack.c.l.b16 %v1335
    %v1468 = vunpack.c.l.b16 %v1336
    %v1469 = vunpack.c.l.b16 %v1337
    %v1470 = vunpack.c.l.b16 %v1338
    %v1471 = vunpack.c.l.b16 %v1339
    %v1472 = vunpack.c.l.b16 %v1340
    %v1473 = vunpack.c.l.b16 %v1341
    %v1474 = vunpack.c.l.b16 %v1342
    %v1475 = vunpack.c.l.b16 %v1343
    %v1476 = vunpack.c.l.b16 %v1344
    %v1477 = vunpack.c.l.b16 %v1345
    %v1478 = vunpack.c.l.b16 %v1346
    %v1479 = vunpack.c.l.b16 %v1347
    %v1480 = vunpack.c.l.b16 %v1348
    %v1481 = vunpack.c.l.b16 %v1349
    %v1482 = vunpack.c.l.b16 %v1350
    %v1483 = vunpack.c.l.b16 %v1351
    %v1484 = vunpack.c.l.b16 %v1352
    %v1485 = vunpack.c.l.b16 %v1353
    %v1486 = vunpack.c.l.b16 %v1354
    %v1487 = vunpack.c.l.b16 %v1355
    %v1488 = vunpack.c.l.b16 %v1356
    %v1489 = vpack.c.b16 %v1426, %v1425
    %v1490 = vpack.c.b16 %v1428, %v1427
    %v1491 = vpack.c.b16 %v1430, %v1429
    %v1492 = vpack.c.b16 %v1432, %v1431
    %v1493 = vpack.c.b16 %v1434, %v1433
    %v1494 = vpack.c.b16 %v1436, %v1435
    %v1495 = vpack.c.b16 %v1438, %v1437
    %v1496 = vpack.c.b16 %v1440, %v1439
    %v1497 = vpack.c.b16 %v1442, %v1441
    %v1498 = vpack.c.b16 %v1444, %v1443
    %v1499 = vpack.c.b16 %v1446, %v1445
    %v1500 = vpack.c.b16 %v1448, %v1447
    %v1501 = vpack.c.b16 %v1450, %v1449
    %v1502 = vpack.c.b16 %v1452, %v1451
    %v1503 = vpack.c.b16 %v1454, %v1453
    %v1504 = vpack.c.b16 %v1456, %v1455
    %v1505 = vpack.c.b16 %v1458, %v1457
    %v1506 = vpack.c.b16 %v1460, %v1459
    %v1507 = vpack.c.b16 %v1462, %v1461
    %v1508 = vpack.c.b16 %v1464, %v1463
    %v1509 = vpack.c.b16 %v1466, %v1465
    %v1510 = vpack.c.b16 %v1468, %v1467
    %v1511 = vpack.c.b16 %v1470, %v1469
    %v1512 = vpack.c.b16 %v1472, %v1471
    %v1513 = vpack.c.b16 %v1474, %v1473
    %v1514 = vpack.c.b16 %v1476, %v1475
    %v1515 = vpack.c.b16 %v1478, %v1477
    %v1516 = vpack.c.b16 %v1480, %v1479
    %v1517 = vpack.c.b16 %v1482, %v1481
    %v1518 = vpack.c.b16 %v1484, %v1483
    %v1519 = vpack.c.b16 %v1486, %v1485
    %v1520 = vpack.c.b16 %v1488, %v1487
    %1553 = vmatpush.bf16.msra.mxu0 %v1496
    %1554 = vmatpush.bf16.msra.mxu0 %v1495
    %1555 = vmatpush.bf16.msra.mxu0 %v1494
    %1556 = vmatpush.bf16.msra.mxu0 %v1493
    %1557 = vmatpush.bf16.msra.mxu0 %v1492
    %1558 = vmatpush.bf16.msra.mxu0 %v1491
    %1559 = vmatpush.bf16.msra.mxu0 %v1490
    %1560 = vmatpush.bf16.msra.mxu0 %v1489
    %1561 = vmatmul.bf16.gmra.mxu0 %v1289
    %v1562 = vpop.f32.mrf.mxu0
    %v1563 = vadd.f32 %v1359, %v1562
    %v1564 = vpop.f32.mrf.mxu0
    %v1565 = vadd.f32 %v1359, %v1564
    %1566 = vdwg.mxu0
    %1567 = vmatpush.bf16.msra.mxu0 %v1504
    %1568 = vmatpush.bf16.msra.mxu0 %v1503
    %1569 = vmatpush.bf16.msra.mxu0 %v1502
    %1570 = vmatpush.bf16.msra.mxu0 %v1501
    %1571 = vmatpush.bf16.msra.mxu0 %v1500
    %1572 = vmatpush.bf16.msra.mxu0 %v1499
    %1573 = vmatpush.bf16.msra.mxu0 %v1498
    %1574 = vmatpush.bf16.msra.mxu0 %v1497
    %1575 = vmatmul.bf16.gmra.mxu0 %v1290
    %v1576 = vpop.f32.mrf.mxu0
    %v1577 = vadd.f32 %v1563, %v1576
    %v1578 = vpop.f32.mrf.mxu0
    %v1579 = vadd.f32 %v1565, %v1578
    %1580 = vdwg.mxu0
    %1581 = vmatpush.bf16.msra.mxu0 %v1512
    %1582 = vmatpush.bf16.msra.mxu0 %v1511
    %1583 = vmatpush.bf16.msra.mxu0 %v1510
    %1584 = vmatpush.bf16.msra.mxu0 %v1509
    %1585 = vmatpush.bf16.msra.mxu0 %v1508
    %1586 = vmatpush.bf16.msra.mxu0 %v1507
    %1587 = vmatpush.bf16.msra.mxu0 %v1506
    %1588 = vmatpush.bf16.msra.mxu0 %v1505
    %1589 = vmatmul.bf16.gmra.mxu0 %v1291
    %v1590 = vpop.f32.mrf.mxu0
    %v1591 = vadd.f32 %v1577, %v1590
    %v1592 = vpop.f32.mrf.mxu0
    %v1593 = vadd.f32 %v1579, %v1592
    %1594 = vdwg.mxu0
    %1595 = vmatpush.bf16.msra.mxu0 %v1520
    %1596 = vmatpush.bf16.msra.mxu0 %v1519
    %1597 = vmatpush.bf16.msra.mxu0 %v1518
    %1598 = vmatpush.bf16.msra.mxu0 %v1517
    %1599 = vmatpush.bf16.msra.mxu0 %v1516
    %1600 = vmatpush.bf16.msra.mxu0 %v1515
    %1601 = vmatpush.bf16.msra.mxu0 %v1514
    %1602 = vmatpush.bf16.msra.mxu0 %v1513
    %1603 = vmatmul.bf16.gmra.mxu0 %v1292
    %v1604 = vpop.f32.mrf.mxu0
    %v1605 = vadd.f32 %v1591, %v1604
    %v1606 = vpop.f32.mrf.mxu0
    %v1607 = vadd.f32 %v1593, %v1606
    %1608 = vdwg.mxu0
    %v1609 = vld [vmem:[%s7] sm:$0x1]
    %v1610 = vld [vmem:[%s8] sm:$0x1]
    %1611 = vadd.xlane.f32.xlu0 %v1605
    %v1612 = vpop.xlane.xlu0 %1611
    %1613 = vadd.xlane.f32.xlu0 %v1607
    %v1614 = vpop.xlane.xlu0 %1613
    %v1615 = vrcp.pop 128.0
    %v1616 = vmul.f32 128.0, %v1615
    %v1617 = vsub.f32 1.0, %v1616
    %v1618 = vmul.f32 %v1615, %v1617
    %v1619 = vadd.f32 %v1615, %v1618
    %vm1620 = vweird.f32 %v1615
    %v1621 = vsel %vm1620, %v1615, %v1619
    %v1622 = vmul.f32 %v1612, %v1621
    %v1623 = vmul.f32 %v1614, %v1621
    %v1624 = vsub.f32 %v1605, %v1622
    %v1625 = vsub.f32 %v1607, %v1623
    %v1626 = vmul.f32 %v1624, %v1624
    %v1627 = vmul.f32 %v1625, %v1625
    %1628 = vadd.xlane.f32.xlu0 %v1626
    %v1629 = vpop.xlane.xlu0 %1628
    %1630 = vadd.xlane.f32.xlu0 %v1627
    %v1631 = vpop.xlane.xlu0 %1630
    %v1632 = vmul.f32 %v1629, %v1621
    %v1633 = vmul.f32 %v1631, %v1621
    %v1634 = vadd.f32 %v1632, 1e-05
    %v1635 = vadd.f32 %v1633, 1e-05
    %v1636 = vrsqrt.pop %v1634
    %v1637 = vmul.f32 %v1636, %v1634
    %v1638 = vmul.f32 %v1637, %v1636
    %v1639 = vmul.f32 0.5, %v1638
    %v1640 = vsub.f32 1.5, %v1639
    %v1641 = vmul.f32 %v1636, %v1640
    %vm1642 = vweird.f32 %v1634
    %vm1643 = vweird.f32 %v1636
    %vm1644 = vmor %vm1642, %vm1643
    %v1645 = vsel %vm1644, %v1636, %v1641
    %v1646 = vrsqrt.pop %v1635
    %v1647 = vmul.f32 %v1646, %v1635
    %v1648 = vmul.f32 %v1647, %v1646
    %v1649 = vmul.f32 0.5, %v1648
    %v1650 = vsub.f32 1.5, %v1649
    %v1651 = vmul.f32 %v1646, %v1650
    %vm1652 = vweird.f32 %v1635
    %vm1653 = vweird.f32 %v1646
    %vm1654 = vmor %vm1652, %vm1653
    %v1655 = vsel %vm1654, %v1646, %v1651
    %v1656 = vmul.f32 %v1624, %v1645
    %v1657 = vmul.f32 %v1625, %v1655
    %v1659 = vperm.slane %v1609, 0
    %v1661 = vmul.f32 %v1656, %v1659
    %v1662 = vmul.f32 %v1657, %v1659
    %v1664 = vperm.slane %v1610, 0
    %v1666 = vadd.f32 %v1661, %v1664
    %v1667 = vadd.f32 %v1662, %v1664
    %v1668 = vmax.f32 %v1666, 0.0
    %v1669 = vmax.f32 %v1667, 0.0
    %v1670 = vpack.c.bf16 %v1669, %v1668
    %v1671 = vld [vmem:[#allocation13] sm:$0xf]
    %v1672 = vld [vmem:[#allocation13 + $0x4] sm:$0xf]
    %v1673 = vld [vmem:[#allocation13 + $0x8] sm:$0xf]
    %v1674 = vld [vmem:[#allocation13 + $0xc] sm:$0xf]
    %v1675 = vld [vmem:[#allocation13 + $0x10] sm:$0xf]
    %v1676 = vld [vmem:[#allocation13 + $0x14] sm:$0xf]
    %v1677 = vld [vmem:[#allocation13 + $0x18] sm:$0xf]
    %v1678 = vld [vmem:[#allocation13 + $0x1c] sm:$0xf]
    %v1679 = vld [vmem:[#allocation13 + $0x20] sm:$0xf]
    %v1680 = vld [vmem:[#allocation13 + $0x24] sm:$0xf]
    %v1681 = vld [vmem:[#allocation13 + $0x28] sm:$0xf]
    %v1682 = vld [vmem:[#allocation13 + $0x2c] sm:$0xf]
    %v1683 = vld [vmem:[#allocation13 + $0x30] sm:$0xf]
    %v1684 = vld [vmem:[#allocation13 + $0x34] sm:$0xf]
    %v1685 = vld [vmem:[#allocation13 + $0x38] sm:$0xf]
    %v1686 = vld [vmem:[#allocation13 + $0x3c] sm:$0xf]
    %v1687 = vld [vmem:[%s10] sm:$0x1]
    %v1689 = vperm.slane %v1687, 0
    %v1707 = vunpack.c.l.b16 %v1671
    %v1708 = vunpack.c.l.b16 %v1672
    %v1709 = vunpack.c.l.b16 %v1673
    %v1710 = vunpack.c.l.b16 %v1674
    %v1711 = vunpack.c.l.b16 %v1675
    %v1712 = vunpack.c.l.b16 %v1676
    %v1713 = vunpack.c.l.b16 %v1677
    %v1714 = vunpack.c.l.b16 %v1678
    %v1715 = vunpack.c.l.b16 %v1679
    %v1716 = vunpack.c.l.b16 %v1680
    %v1717 = vunpack.c.l.b16 %v1681
    %v1718 = vunpack.c.l.b16 %v1682
    %v1719 = vunpack.c.l.b16 %v1683
    %v1720 = vunpack.c.l.b16 %v1684
    %v1721 = vunpack.c.l.b16 %v1685
    %v1722 = vunpack.c.l.b16 %v1686
    %v1723 = vpack.c.b16 %v1708, %v1707
    %v1724 = vpack.c.b16 %v1710, %v1709
    %v1725 = vpack.c.b16 %v1712, %v1711
    %v1726 = vpack.c.b16 %v1714, %v1713
    %v1727 = vpack.c.b16 %v1716, %v1715
    %v1728 = vpack.c.b16 %v1718, %v1717
    %v1729 = vpack.c.b16 %v1720, %v1719
    %v1730 = vpack.c.b16 %v1722, %v1721
    %1739 = vmatpush.bf16.msra.mxu0 %v1730
    %1740 = vmatpush.bf16.msra.mxu0 %v1729
    %1741 = vmatpush.bf16.msra.mxu0 %v1728
    %1742 = vmatpush.bf16.msra.mxu0 %v1727
    %1743 = vmatpush.bf16.msra.mxu0 %v1726
    %1744 = vmatpush.bf16.msra.mxu0 %v1725
    %1745 = vmatpush.bf16.msra.mxu0 %v1724
    %1746 = vmatpush.bf16.msra.mxu0 %v1723
    %1747 = vmatmul.bf16.gmra.mxu0 %v1670
    %v1748 = vpop.f32.mrf.mxu0
    %v1749 = vadd.f32 %v1689, %v1748
    %v1750 = vpop.f32.mrf.mxu0
    %v1751 = vadd.f32 %v1689, %v1750
    %1752 = vdwg.mxu0
    %1753 = vst [vmem:[#allocation14] sm:$0xff] %v1749
    %1754 = vst [vmem:[#allocation14 + $0x8] sm:$0xff] %v1751
    // Predicated region
    $region74: #{tpu_custom_call.1} parent=1 // pred_check
      _
    $region75: #{tpu_custom_call.1} parent=1 // pred_check_branch
      %1756 = sbr.rel (0) target = $region77
    $region76: #{tpu_custom_call.1} parent=1 // pred_region
      %1758 = vsyncadd [#allocation4], 0
      %s1759 = sshll.u32 [#allocation14], 4
      %s1760 = int_to_ptr.vmem [resolvable:$true] %s1759
      %s1761 = sshll.u32 %s11, 4
      %s1762 = int_to_ptr.hbm [resolvable:$true] %s1761
      %1767 = dma.vmem_to_hbm [thread:$0]  %s1760, 256, %s1762, [#allocation4], 128, 128, 8
    $region77: #{tpu_custom_call.1} parent=1 // pred_fallthru
      _
    // Predicated region
    $region78: #{tpu_custom_call.1} parent=1 // pred_check
      _
    $region79: #{tpu_custom_call.1} parent=1 // pred_check_branch
      %1769 = sbr.rel (0) target = $region81
    $region80: #{tpu_custom_call.1} parent=1 // pred_region
      %1771 = dma.done [#allocation4], 256
    $region81: #{tpu_custom_call.1} parent=1 // pred_fallthru
      _
    %1772 = vsyncpa [#allocation3], 1
    %1773 = vsyncpa [#allocation6], 1
    %1774 = vsyncpa [#allocation9], 1
    %1775 = vsyncpa [#allocation12], 1
    %1776 = vsyncpa [#allocation4], 1

</llo_original>
